<compile_context>
chip_gen: v7x
topology: tpu7x:2x2x1
jax: 0.10.0
libtpu: 0.0.40
codegen_flags: <defaults>
</compile_context>

<pallas_src>
import jax
import jax.numpy as jnp
from jax.experimental import pallas as pl
from jax.experimental.pallas import tpu as pltpu


# ---------------------------------------------------------------------------
# Shared per-step math (traced inside both the single-step and fused kernels)
# ---------------------------------------------------------------------------
def _attn_enc_proj(enc, wa_e, ba):
    """Step-invariant encoder projection for the attention energy term: enc @ wa_e + ba."""
    proj = jax.lax.dot_general(enc, wa_e, (((2,), (0,)), ((), ())),
                               preferred_element_type=jnp.float32)        # (B, S, H)
    return proj + ba[None, :, :]


def _decoder_step(emb, hid, enc, enc_proj, mask_add,
                  v, w_hid, w_emb, w_wgt, bih, bhh, wf_h, bf):
    H = hid.shape[1]

    # Fused matmul #1: hid @ [wa_h | whh]  -> (B, H + 3H)
    hid_all = jnp.dot(hid, w_hid, preferred_element_type=jnp.float32)
    hid_proj = hid_all[:, :H]                       # attention query projection (B, H)
    gh = hid_all[:, H:] + bhh                       # GRU hidden-path gates      (B, 3H)

    # ---------------- Attention (enc_proj precomputed / hoisted) ----------------
    energy = jnp.tanh(enc_proj + hid_proj[:, None, :])             # (B, S, H)
    scores = jnp.sum(energy * v[None, :, :], axis=2) + mask_add    # (B, S), additive mask
    m = jnp.max(scores, axis=1, keepdims=True)
    e = jnp.exp(scores - m)
    attn = e * pl.reciprocal(jnp.sum(e, axis=1, keepdims=True))    # softmax(dim=1)
    weighted = jnp.sum(attn[:, :, None] * enc, axis=1)             # bmm(a, enc) -> (B, E2)

    # Fused matmuls #2/#3: emb @ [wih_e | wf_e], weighted @ [wih_w | wf_w]  -> (B, 3H + O)
    emb_all = jnp.dot(emb, w_emb, preferred_element_type=jnp.float32)
    wgt_all = jnp.dot(weighted, w_wgt, preferred_element_type=jnp.float32)

    gi = emb_all[:, :3 * H] + wgt_all[:, :3 * H] + bih             # GRU input-path gates
    fc_pre = emb_all[:, 3 * H:] + wgt_all[:, 3 * H:]               # fc_out partial sums

    # ---------------- GRU cell (seq len 1 -> output == new hidden) ----------------
    r = jax.nn.sigmoid(gi[:, :H] + gh[:, :H])
    z = jax.nn.sigmoid(gi[:, H:2 * H] + gh[:, H:2 * H])
    n = jnp.tanh(gi[:, 2 * H:] + r * gh[:, 2 * H:])
    h_new = (1.0 - z) * n + z * hid

    # ---------------- fc_out on cat(output, weighted, embedded) ----------------
    pred = jnp.dot(h_new, wf_h, preferred_element_type=jnp.float32) + fc_pre + bf
    return pred, h_new, attn


# ---------------------------------------------------------------------------
# Kernels
# ---------------------------------------------------------------------------
def _decoder_step_kernel(emb_ref, hid_ref, enc_ref, maskadd_ref,
                         wa_e_ref, ba_ref, v_ref, w_hid_ref, w_emb_ref, w_wgt_ref,
                         bih_ref, bhh_ref, wf_h_ref, bf_ref,
                         pred_ref, hid_out_ref, a_ref):
    enc = enc_ref[...]
    enc_proj = _attn_enc_proj(enc, wa_e_ref[...], ba_ref[...])
    pred, h_new, attn = _decoder_step(
        emb_ref[...], hid_ref[...], enc, enc_proj, maskadd_ref[...],
        v_ref[...], w_hid_ref[...], w_emb_ref[...], w_wgt_ref[...],
        bih_ref[...], bhh_ref[...], wf_h_ref[...], bf_ref[...])
    pred_ref[...] = pred
    hid_out_ref[...] = h_new
    a_ref[...] = attn


def _decoder_multistep_kernel(emb_ref, hid0_ref, enc_ref, maskadd_ref,
                              wa_e_ref, ba_ref, v_ref, w_hid_ref, w_emb_ref, w_wgt_ref,
                              bih_ref, bhh_ref, wf_h_ref, bf_ref,
                              pred_ref, hid_out_ref, a_ref,
                              h_carry, encp_carry):
    t = pl.program_id(0)

    @pl.when(t == 0)
    def _():
        # One-time initialization: carried hidden state + hoisted encoder projection.
        h_carry[...] = hid0_ref[...]
        encp_carry[...] = _attn_enc_proj(enc_ref[...], wa_e_ref[...], ba_ref[...])

    pred, h_new, attn = _decoder_step(
        emb_ref[0], h_carry[...], enc_ref[...], encp_carry[...], maskadd_ref[...],
        v_ref[...], w_hid_ref[...], w_emb_ref[...], w_wgt_ref[...],
        bih_ref[...], bhh_ref[...], wf_h_ref[...], bf_ref[...])
    h_carry[...] = h_new
    pred_ref[0] = pred
    hid_out_ref[0] = h_new
    a_ref[0] = attn


# ---------------------------------------------------------------------------
# Glue: parameter prep (weight fusion) + forward wrappers
# ---------------------------------------------------------------------------
def prepare_params(params):
    """Concatenate weights that share an LHS (fewer MXU pushes in-kernel)."""
    return dict(
        embedding=params["embedding"],
        wa_e=params["wa_e"], ba=params["ba"], v=params["v"],
        w_hid=jnp.concatenate([params["wa_h"], params["whh"]], axis=1),   # (H, H+3H)
        w_emb=jnp.concatenate([params["wih_e"], params["wf_e"]], axis=1), # (E, 3H+O)
        w_wgt=jnp.concatenate([params["wih_w"], params["wf_w"]], axis=1), # (E2, 3H+O)
        bih=params["bih"], bhh=params["bhh"],
        wf_h=params["wf_h"], bf=params["bf"],
    )


def _weight_args(prepped):
    return (prepped["wa_e"], prepped["ba"], prepped["v"],
            prepped["w_hid"], prepped["w_emb"], prepped["w_wgt"],
            prepped["bih"], prepped["bhh"], prepped["wf_h"], prepped["bf"])


def decoder_forward(input_ids, hidden, encoder_outputs, mask, params):
    """Single decode step, matching Decoder.forward.
    input_ids: (B,) int32; hidden: (B, H); encoder_outputs: (S, B, 2*Henc); mask: (B, S)."""
    prepped = prepare_params(params)
    enc = jnp.transpose(encoder_outputs, (1, 0, 2))                  # (B, S, E2)
    emb = prepped["embedding"][input_ids]                            # (B, E)
    mask_add = (mask.astype(jnp.float32) - 1.0) * 1e10               # 0 valid / -1e10 padded

    B, S, E2 = enc.shape
    H = hidden.shape[1]
    E = emb.shape[1]
    O = prepped["bf"].shape[1]

    vmem = pl.BlockSpec(memory_space=pltpu.MemorySpace.VMEM)
    args = (emb, hidden, enc, mask_add) + _weight_args(prepped)

    flops = 2 * B * (S * E2 * H + H * 4 * H + E * (3 * H + O) + E2 * (3 * H + O)
                     + H * O + S * H + S * E2)
    trans = B * S * H + B * S + 3 * B * H
    bytes_accessed = 4 * (sum(int(a.size) for a in args) + B * (O + H + S))
    cost = pl.CostEstimate(flops=flops, transcendentals=trans,
                           bytes_accessed=bytes_accessed)

    pred, hid_new, a = pl.pallas_call(
        _decoder_step_kernel,
        out_shape=(jax.ShapeDtypeStruct((B, O), jnp.float32),
                   jax.ShapeDtypeStruct((B, H), jnp.float32),
                   jax.ShapeDtypeStruct((B, S), jnp.float32)),
        in_specs=[vmem] * len(args),
        out_specs=(vmem, vmem, vmem),
        cost_estimate=cost,
    )(*args)
    return pred, hid_new, a


def decoder_forward_fused_steps(input_ids_seq, hidden0, encoder_outputs, mask, params):
    """T teacher-forced decode steps fused into one pallas_call (grid=(T,)).
    input_ids_seq: (T, B) int32. Returns per-step (preds, hiddens, attns)."""
    prepped = prepare_params(params)
    enc = jnp.transpose(encoder_outputs, (1, 0, 2))                  # (B, S, E2)
    T, B = input_ids_seq.shape
    emb_seq = prepped["embedding"][input_ids_seq]                    # (T, B, E)
    mask_add = (mask.astype(jnp.float32) - 1.0) * 1e10

    S, E2 = enc.shape[1], enc.shape[2]
    H = hidden0.shape[1]
    E = emb_seq.shape[2]
    O = prepped["bf"].shape[1]

    def const(shape):
        # Full-array block with a constant index_map -> stays VMEM-resident across steps.
        return pl.BlockSpec(shape, lambda t, _n=len(shape): (0,) * _n)

    weights = _weight_args(prepped)
    in_specs = [
        pl.BlockSpec((1, B, E), lambda t: (t, 0, 0)),   # per-step embedded tokens
        const((B, H)),                                  # initial hidden
        const((B, S, E2)),                              # encoder outputs
        const((B, S)),                                  # additive mask
    ] + [const(w.shape) for w in weights]
    out_specs = (
        pl.BlockSpec((1, B, O), lambda t: (t, 0, 0)),
        pl.BlockSpec((1, B, H), lambda t: (t, 0, 0)),
        pl.BlockSpec((1, B, S), lambda t: (t, 0, 0)),
    )

    per_step_flops = 2 * B * (H * 4 * H + E * (3 * H + O) + E2 * (3 * H + O)
                              + H * O + S * H + S * E2)
    flops = T * per_step_flops + 2 * B * S * E2 * H
    trans = T * (B * S * H + B * S + 3 * B * H)
    bytes_accessed = 4 * (int(emb_seq.size) + int(enc.size) + int(mask_add.size)
                          + int(hidden0.size) + sum(int(w.size) for w in weights)
                          + T * B * (O + H + S))
    cost = pl.CostEstimate(flops=flops, transcendentals=trans,
                           bytes_accessed=bytes_accessed)

    preds, hids, attns = pl.pallas_call(
        _decoder_multistep_kernel,
        grid=(T,),
        out_shape=(jax.ShapeDtypeStruct((T, B, O), jnp.float32),
                   jax.ShapeDtypeStruct((T, B, H), jnp.float32),
                   jax.ShapeDtypeStruct((T, B, S), jnp.float32)),
        in_specs=in_specs,
        out_specs=out_specs,
        scratch_shapes=[pltpu.VMEM((B, H), jnp.float32),       # carried hidden state
                        pltpu.VMEM((B, S, H), jnp.float32)],   # hoisted encoder projection
        compiler_params=pltpu.CompilerParams(dimension_semantics=("arbitrary",)),
        cost_estimate=cost,
    )(emb_seq, hidden0, enc, mask_add, *weights)
    return preds, hids, attns


# ---------------------------------------------------------------------------
# Pure-JAX reference mirroring the PyTorch forward (split weights, masked_fill)
# ---------------------------------------------------------------------------
def decoder_reference(input_ids, hidden, encoder_outputs, mask, params):
    emb = params["embedding"][input_ids]
    enc = jnp.transpose(encoder_outputs, (1, 0, 2))
    B, S, E2 = enc.shape
    hid_proj = hidden @ params["wa_h"]
    enc_proj = (enc.reshape(B * S, E2) @ params["wa_e"]).reshape(B, S, -1)
    energy = jnp.tanh(enc_proj + hid_proj[:, None, :] + params["ba"][None, :, :])
    scores = jnp.sum(energy * params["v"][None, :, :], axis=2)
    scores = jnp.where(mask > 0, scores, -1e10)
    attn = jax.nn.softmax(scores, axis=1)
    weighted = jnp.sum(attn[:, :, None] * enc, axis=1)
    H = hidden.shape[1]
    gi = emb @ params["wih_e"] + weighted @ params["wih_w"] + params["bih"]
    gh = hidden @ params["whh"] + params["bhh"]
    r = jax.nn.sigmoid(gi[:, :H] + gh[:, :H])
    z = jax.nn.sigmoid(gi[:, H:2 * H] + gh[:, H:2 * H])
    n = jnp.tanh(gi[:, 2 * H:] + r * gh[:, 2 * H:])
    h_new = (1.0 - z) * n + z * hidden
    pred = h_new @ params["wf_h"] + weighted @ params["wf_w"] + emb @ params["wf_e"] + params["bf"]
    return pred, h_new, attn


if __name__ == "__main__":
    # Module hyperparameters (small, consistent with the forward pass)
    B, S = 8, 8                 # batch, source sequence length
    ENC_HID, DEC_HID = 16, 32   # encoder / decoder hidden dims
    E2 = 2 * ENC_HID            # bidirectional encoder output dim
    EMB = 24                    # decoder embedding dim
    VOCAB = 40                  # dec_output_dim
    T = 5                       # decode steps for the fused multi-step variant

    key = jax.random.PRNGKey(0)
    ks = iter(jax.random.split(key, 32))

    def init(shape, scale=0.1):
        return (scale * jax.random.normal(next(ks), shape)).astype(jnp.float32)

    params = {
        "embedding": init((VOCAB, EMB)),
        # Attention: attn Linear (H + E2 -> H) split into hidden / encoder blocks, v (H -> 1)
        "wa_h": init((DEC_HID, DEC_HID)), "wa_e": init((E2, DEC_HID)), "ba": init((1, DEC_HID)),
        "v": init((1, DEC_HID)),
        # GRU: W_ih (EMB + E2 -> 3H) split, W_hh (H -> 3H), biases
        "wih_e": init((EMB, 3 * DEC_HID)), "wih_w": init((E2, 3 * DEC_HID)),
        "whh": init((DEC_HID, 3 * DEC_HID)),
        "bih": init((1, 3 * DEC_HID)), "bhh": init((1, 3 * DEC_HID)),
        # fc_out: (H + E2 + EMB -> VOCAB) split
        "wf_h": init((DEC_HID, VOCAB)), "wf_w": init((E2, VOCAB)), "wf_e": init((EMB, VOCAB)),
        "bf": init((1, VOCAB)),
    }

    input_ids = jax.random.randint(next(ks), (B,), 0, VOCAB, dtype=jnp.int32)
    hidden = init((B, DEC_HID), scale=0.5)
    encoder_outputs = init((S, B, E2), scale=0.5)          # PyTorch layout (src_len, batch, 2*enc_hid)
    lengths = jax.random.randint(next(ks), (B,), 1, S + 1)
    mask = (jnp.arange(S)[None, :] < lengths[:, None]).astype(jnp.float32)   # (B, S)
    input_ids_seq = jax.random.randint(next(ks), (T, B), 0, VOCAB, dtype=jnp.int32)

    # ---- single-step kernel (matches Decoder.forward) ----
    pred, hid_new, attn = decoder_forward(input_ids, hidden, encoder_outputs, mask, params)
    jax.block_until_ready((pred, hid_new, attn))

    pred_r, hid_r, attn_r = decoder_reference(input_ids, hidden, encoder_outputs, mask, params)
    assert jnp.allclose(pred, pred_r, atol=1e-4, rtol=1e-4)
    assert jnp.allclose(hid_new, hid_r, atol=1e-4, rtol=1e-4)
    assert jnp.allclose(attn, attn_r, atol=1e-4, rtol=1e-4)

    # ---- fused T-step kernel (weights + enc_proj VMEM-resident, hidden carried in scratch) ----
    preds_f, hids_f, attns_f = decoder_forward_fused_steps(
        input_ids_seq, hidden, encoder_outputs, mask, params)
    jax.block_until_ready((preds_f, hids_f, attns_f))

    h_ref = hidden
    for t in range(T):
        p_ref, h_ref, a_ref = decoder_reference(input_ids_seq[t], h_ref,
                                                encoder_outputs, mask, params)
        assert jnp.allclose(preds_f[t], p_ref, atol=1e-4, rtol=1e-4)
        assert jnp.allclose(hids_f[t], h_ref, atol=1e-4, rtol=1e-4)
        assert jnp.allclose(attns_f[t], a_ref, atol=1e-4, rtol=1e-4)

    print("KERNEL_OK")
</pallas_src>

<mosaic_0001>
module attributes {stable_mosaic.version = 11 : i64} {
  func.func @_decoder_step_kernel(%arg0: memref<8x24xf32, #tpu.memory_space<vmem>>, %arg1: memref<8x32xf32, #tpu.memory_space<vmem>>, %arg2: memref<8x8x32xf32, #tpu.memory_space<vmem>>, %arg3: memref<8x8xf32, #tpu.memory_space<vmem>>, %arg4: memref<32x32xf32, #tpu.memory_space<vmem>>, %arg5: memref<1x32xf32, #tpu.memory_space<vmem>>, %arg6: memref<1x32xf32, #tpu.memory_space<vmem>>, %arg7: memref<32x128xf32, #tpu.memory_space<vmem>>, %arg8: memref<24x136xf32, #tpu.memory_space<vmem>>, %arg9: memref<32x136xf32, #tpu.memory_space<vmem>>, %arg10: memref<1x96xf32, #tpu.memory_space<vmem>>, %arg11: memref<1x96xf32, #tpu.memory_space<vmem>>, %arg12: memref<32x40xf32, #tpu.memory_space<vmem>>, %arg13: memref<1x40xf32, #tpu.memory_space<vmem>>, %arg14: memref<8x40xf32, #tpu.memory_space<vmem>>, %arg15: memref<8x32xf32, #tpu.memory_space<vmem>>, %arg16: memref<8x8xf32, #tpu.memory_space<vmem>>) attributes {dimension_semantics = [], scalar_prefetch = 0 : i64, scratch_operands = 0 : i64, tpu.core_type = #tpu.core_type<tc>} {
    %c0 = arith.constant 0 : index
    %c0_0 = arith.constant 0 : index
    %c0_1 = arith.constant 0 : index
    %0 = vector.load %arg2[%c0, %c0_0, %c0_1] : memref<8x8x32xf32, #tpu.memory_space<vmem>>, vector<8x8x32xf32>
    %c0_2 = arith.constant 0 : index
    %c0_3 = arith.constant 0 : index
    %1 = vector.load %arg4[%c0_2, %c0_3] : memref<32x32xf32, #tpu.memory_space<vmem>>, vector<32x32xf32>
    %c0_4 = arith.constant 0 : index
    %c0_5 = arith.constant 0 : index
    %2 = vector.load %arg5[%c0_4, %c0_5] : memref<1x32xf32, #tpu.memory_space<vmem>>, vector<1x32xf32>
    %cst = arith.constant dense<0.000000e+00> : vector<8x8x32xf32>
    %3 = tpu.matmul %0, %1, %cst {dimension_numbers = #tpu.dot_dimension_numbers<[2], [0], [0, 1], [1], [0, 0, 0, 1, 1, 1], [], []>} : vector<8x8x32xf32>, vector<32x32xf32>, vector<8x8x32xf32> -> vector<8x8x32xf32>
    %4 = vector.shape_cast %2 : vector<1x32xf32> to vector<1x1x32xf32>
    %5 = vector.broadcast %4 : vector<1x1x32xf32> to vector<8x8x32xf32>
    %6 = arith.addf %3, %5 : vector<8x8x32xf32>
    %c0_6 = arith.constant 0 : index
    %c0_7 = arith.constant 0 : index
    %7 = vector.load %arg0[%c0_6, %c0_7] : memref<8x24xf32, #tpu.memory_space<vmem>>, vector<8x24xf32>
    %c0_8 = arith.constant 0 : index
    %c0_9 = arith.constant 0 : index
    %8 = vector.load %arg1[%c0_8, %c0_9] : memref<8x32xf32, #tpu.memory_space<vmem>>, vector<8x32xf32>
    %c0_10 = arith.constant 0 : index
    %c0_11 = arith.constant 0 : index
    %9 = vector.load %arg3[%c0_10, %c0_11] : memref<8x8xf32, #tpu.memory_space<vmem>>, vector<8x8xf32>
    %c0_12 = arith.constant 0 : index
    %c0_13 = arith.constant 0 : index
    %10 = vector.load %arg6[%c0_12, %c0_13] : memref<1x32xf32, #tpu.memory_space<vmem>>, vector<1x32xf32>
    %c0_14 = arith.constant 0 : index
    %c0_15 = arith.constant 0 : index
    %11 = vector.load %arg7[%c0_14, %c0_15] : memref<32x128xf32, #tpu.memory_space<vmem>>, vector<32x128xf32>
    %c0_16 = arith.constant 0 : index
    %c0_17 = arith.constant 0 : index
    %12 = vector.load %arg8[%c0_16, %c0_17] : memref<24x136xf32, #tpu.memory_space<vmem>>, vector<24x136xf32>
    %c0_18 = arith.constant 0 : index
    %c0_19 = arith.constant 0 : index
    %13 = vector.load %arg9[%c0_18, %c0_19] : memref<32x136xf32, #tpu.memory_space<vmem>>, vector<32x136xf32>
    %c0_20 = arith.constant 0 : index
    %c0_21 = arith.constant 0 : index
    %14 = vector.load %arg10[%c0_20, %c0_21] : memref<1x96xf32, #tpu.memory_space<vmem>>, vector<1x96xf32>
    %c0_22 = arith.constant 0 : index
    %c0_23 = arith.constant 0 : index
    %15 = vector.load %arg11[%c0_22, %c0_23] : memref<1x96xf32, #tpu.memory_space<vmem>>, vector<1x96xf32>
    %c0_24 = arith.constant 0 : index
    %c0_25 = arith.constant 0 : index
    %16 = vector.load %arg12[%c0_24, %c0_25] : memref<32x40xf32, #tpu.memory_space<vmem>>, vector<32x40xf32>
    %c0_26 = arith.constant 0 : index
    %c0_27 = arith.constant 0 : index
    %17 = vector.load %arg13[%c0_26, %c0_27] : memref<1x40xf32, #tpu.memory_space<vmem>>, vector<1x40xf32>
    %cst_28 = arith.constant dense<0.000000e+00> : vector<8x128xf32>
    %18 = tpu.matmul %8, %11, %cst_28 {dimension_numbers = #tpu.dot_dimension_numbers<[1], [0], [0], [1], [0, 0, 1, 1], [], []>} : vector<8x32xf32>, vector<32x128xf32>, vector<8x128xf32> -> vector<8x128xf32>
    %19 = vector.extract_strided_slice %18 {offsets = [0, 0], sizes = [8, 32], strides = [1, 1]} : vector<8x128xf32> to vector<8x32xf32>
    %20 = vector.extract_strided_slice %18 {offsets = [0, 32], sizes = [8, 96], strides = [1, 1]} : vector<8x128xf32> to vector<8x96xf32>
    %21 = vector.broadcast %15 : vector<1x96xf32> to vector<8x96xf32>
    %22 = arith.addf %20, %21 : vector<8x96xf32>
    %23 = vector.shape_cast %19 : vector<8x32xf32> to vector<8x1x32xf32>
    %24 = vector.broadcast %23 : vector<8x1x32xf32> to vector<8x8x32xf32>
    %25 = arith.addf %6, %24 : vector<8x8x32xf32>
    %26 = math.tanh %25 : vector<8x8x32xf32>
    %27 = vector.shape_cast %10 : vector<1x32xf32> to vector<1x1x32xf32>
    %28 = vector.broadcast %27 : vector<1x1x32xf32> to vector<8x8x32xf32>
    %29 = arith.mulf %26, %28 : vector<8x8x32xf32>
    %cst_29 = arith.constant dense<0.000000e+00> : vector<8x8xf32>
    %30 = vector.multi_reduction <add>, %29, %cst_29 [2] : vector<8x8x32xf32> to vector<8x8xf32>
    %31 = arith.addf %30, %9 : vector<8x8xf32>
    %cst_30 = arith.constant dense<0xFF800000> : vector<8xf32>
    %32 = vector.multi_reduction <maximumf>, %31, %cst_30 [1] : vector<8x8xf32> to vector<8xf32>
    %33 = vector.shape_cast %32 : vector<8xf32> to vector<8x1xf32>
    %34 = vector.broadcast %33 : vector<8x1xf32> to vector<8x8xf32>
    %35 = arith.subf %31, %34 : vector<8x8xf32>
    %36 = math.exp %35 : vector<8x8xf32>
    %cst_31 = arith.constant dense<0.000000e+00> : vector<8xf32>
    %37 = vector.multi_reduction <add>, %36, %cst_31 [1] : vector<8x8xf32> to vector<8xf32>
    %38 = vector.shape_cast %37 : vector<8xf32> to vector<8x1xf32>
    %39 = tpu.reciprocal %38 : vector<8x1xf32> -> vector<8x1xf32>
    %40 = vector.broadcast %39 : vector<8x1xf32> to vector<8x8xf32>
    %41 = arith.mulf %36, %40 : vector<8x8xf32>
    %42 = vector.shape_cast %41 : vector<8x8xf32> to vector<8x8x1xf32>
    %43 = vector.broadcast %42 : vector<8x8x1xf32> to vector<8x8x32xf32>
    %44 = arith.mulf %43, %0 : vector<8x8x32xf32>
    %cst_32 = arith.constant dense<0.000000e+00> : vector<8x32xf32>
    %45 = vector.multi_reduction <add>, %44, %cst_32 [1] : vector<8x8x32xf32> to vector<8x32xf32>
    %cst_33 = arith.constant dense<0.000000e+00> : vector<8x136xf32>
    %46 = tpu.matmul %7, %12, %cst_33 {dimension_numbers = #tpu.dot_dimension_numbers<[1], [0], [0], [1], [0, 0, 1, 1], [], []>} : vector<8x24xf32>, vector<24x136xf32>, vector<8x136xf32> -> vector<8x136xf32>
    %cst_34 = arith.constant dense<0.000000e+00> : vector<8x136xf32>
    %47 = tpu.matmul %45, %13, %cst_34 {dimension_numbers = #tpu.dot_dimension_numbers<[1], [0], [0], [1], [0, 0, 1, 1], [], []>} : vector<8x32xf32>, vector<32x136xf32>, vector<8x136xf32> -> vector<8x136xf32>
    %48 = vector.extract_strided_slice %46 {offsets = [0, 0], sizes = [8, 96], strides = [1, 1]} : vector<8x136xf32> to vector<8x96xf32>
    %49 = vector.extract_strided_slice %47 {offsets = [0, 0], sizes = [8, 96], strides = [1, 1]} : vector<8x136xf32> to vector<8x96xf32>
    %50 = arith.addf %48, %49 : vector<8x96xf32>
    %51 = vector.broadcast %14 : vector<1x96xf32> to vector<8x96xf32>
    %52 = arith.addf %50, %51 : vector<8x96xf32>
    %53 = vector.extract_strided_slice %46 {offsets = [0, 96], sizes = [8, 40], strides = [1, 1]} : vector<8x136xf32> to vector<8x40xf32>
    %54 = vector.extract_strided_slice %47 {offsets = [0, 96], sizes = [8, 40], strides = [1, 1]} : vector<8x136xf32> to vector<8x40xf32>
    %55 = arith.addf %53, %54 : vector<8x40xf32>
    %56 = vector.extract_strided_slice %52 {offsets = [0, 0], sizes = [8, 32], strides = [1, 1]} : vector<8x96xf32> to vector<8x32xf32>
    %57 = vector.extract_strided_slice %22 {offsets = [0, 0], sizes = [8, 32], strides = [1, 1]} : vector<8x96xf32> to vector<8x32xf32>
    %58 = arith.addf %56, %57 : vector<8x32xf32>
    %59 = arith.negf %58 : vector<8x32xf32>
    %60 = math.exp %59 : vector<8x32xf32>
    %cst_35 = arith.constant 1.000000e+00 : f32
    %61 = vector.broadcast %cst_35 : f32 to vector<8x32xf32>
    %62 = arith.addf %61, %60 : vector<8x32xf32>
    %63 = arith.divf %61, %62 : vector<8x32xf32>
    %64 = vector.extract_strided_slice %52 {offsets = [0, 32], sizes = [8, 32], strides = [1, 1]} : vector<8x96xf32> to vector<8x32xf32>
    %65 = vector.extract_strided_slice %22 {offsets = [0, 32], sizes = [8, 32], strides = [1, 1]} : vector<8x96xf32> to vector<8x32xf32>
    %66 = arith.addf %64, %65 : vector<8x32xf32>
    %67 = arith.negf %66 : vector<8x32xf32>
    %68 = math.exp %67 : vector<8x32xf32>
    %cst_36 = arith.constant 1.000000e+00 : f32
    %69 = vector.broadcast %cst_36 : f32 to vector<8x32xf32>
    %70 = arith.addf %69, %68 : vector<8x32xf32>
    %71 = arith.divf %69, %70 : vector<8x32xf32>
    %72 = vector.extract_strided_slice %52 {offsets = [0, 64], sizes = [8, 32], strides = [1, 1]} : vector<8x96xf32> to vector<8x32xf32>
    %73 = vector.extract_strided_slice %22 {offsets = [0, 64], sizes = [8, 32], strides = [1, 1]} : vector<8x96xf32> to vector<8x32xf32>
    %74 = arith.mulf %63, %73 : vector<8x32xf32>
    %75 = arith.addf %72, %74 : vector<8x32xf32>
    %76 = math.tanh %75 : vector<8x32xf32>
    %cst_37 = arith.constant 1.000000e+00 : f32
    %77 = vector.broadcast %cst_37 : f32 to vector<8x32xf32>
    %78 = arith.subf %77, %71 : vector<8x32xf32>
    %79 = arith.mulf %78, %76 : vector<8x32xf32>
    %80 = arith.mulf %71, %8 : vector<8x32xf32>
    %81 = arith.addf %79, %80 : vector<8x32xf32>
    %cst_38 = arith.constant dense<0.000000e+00> : vector<8x40xf32>
    %82 = tpu.matmul %81, %16, %cst_38 {dimension_numbers = #tpu.dot_dimension_numbers<[1], [0], [0], [1], [0, 0, 1, 1], [], []>} : vector<8x32xf32>, vector<32x40xf32>, vector<8x40xf32> -> vector<8x40xf32>
    %83 = arith.addf %82, %55 : vector<8x40xf32>
    %84 = vector.broadcast %17 : vector<1x40xf32> to vector<8x40xf32>
    %85 = arith.addf %83, %84 : vector<8x40xf32>
    %c0_39 = arith.constant 0 : index
    %c0_40 = arith.constant 0 : index
    %86 = vector.load %arg14[%c0_39, %c0_40] : memref<8x40xf32, #tpu.memory_space<vmem>>, vector<8x40xf32>
    tpu.vector_store %arg14[%c0_39, %c0_40], %85 {strides = array<i32>} : memref<8x40xf32, #tpu.memory_space<vmem>>, vector<8x40xf32>,
    %c0_41 = arith.constant 0 : index
    %c0_42 = arith.constant 0 : index
    %87 = vector.load %arg15[%c0_41, %c0_42] : memref<8x32xf32, #tpu.memory_space<vmem>>, vector<8x32xf32>
    tpu.vector_store %arg15[%c0_41, %c0_42], %81 {strides = array<i32>} : memref<8x32xf32, #tpu.memory_space<vmem>>, vector<8x32xf32>,
    %c0_43 = arith.constant 0 : index
    %c0_44 = arith.constant 0 : index
    %88 = vector.load %arg16[%c0_43, %c0_44] : memref<8x8xf32, #tpu.memory_space<vmem>>, vector<8x8xf32>
    tpu.vector_store %arg16[%c0_43, %c0_44], %41 {strides = array<i32>} : memref<8x8xf32, #tpu.memory_space<vmem>>, vector<8x8xf32>,
    return
  }
}

</mosaic_0001>

<llo_original>
// kernel: tpu_custom_call.1
$region0: #{tpu_custom_call.1}
  #allocation0 [shape = 'u32[]', space=smem, size = 0x4, offset = 0x4, fixed_abs, tag = 'smem constant byte address 0x4 - core index']
  #allocation1 [shape = 'u32[144,128]{1,0:T(1,128)}', space=vmem, size = 0x12000, scoped, tag = 'internal scratch']
  %s0 = inlined_call_operand.hbm [shape: f32[8,24], index: 0, kind: input, shape index: {}]
  %s1 = inlined_call_operand.hbm [shape: f32[8,32], index: 1, kind: input, shape index: {}]
  %s2 = inlined_call_operand.hbm [shape: f32[8,8,32], index: 2, kind: input, shape index: {}]
  %s3 = inlined_call_operand.vmem [shape: f32[8,8], index: 3, kind: input, shape index: {}]
  %s4 = inlined_call_operand.hbm [shape: f32[32,32], index: 4, kind: input, shape index: {}]
  %s5 = inlined_call_operand.vmem [shape: f32[1,32], index: 5, kind: input, shape index: {}]
  %s6 = inlined_call_operand.vmem [shape: f32[1,32], index: 6, kind: input, shape index: {}]
  %s7 = inlined_call_operand.hbm [shape: f32[32,128], index: 7, kind: input, shape index: {}]
  %s8 = inlined_call_operand.hbm [shape: f32[24,136], index: 8, kind: input, shape index: {}]
  %s9 = inlined_call_operand.hbm [shape: f32[32,136], index: 9, kind: input, shape index: {}]
  %s10 = inlined_call_operand.vmem [shape: f32[1,96], index: 10, kind: input, shape index: {}]
  %s11 = inlined_call_operand.vmem [shape: f32[1,96], index: 11, kind: input, shape index: {}]
  %s12 = inlined_call_operand.vmem [shape: f32[32,40], index: 12, kind: input, shape index: {}]
  %s13 = inlined_call_operand.vmem [shape: f32[1,40], index: 13, kind: input, shape index: {}]
  %s14 = inlined_call_operand.hbm [shape: f32[8,40], index: 14, kind: output, shape index: {0}]
  %s15 = inlined_call_operand.hbm [shape: f32[8,32], index: 15, kind: output, shape index: {1}]
  %s16 = inlined_call_operand.hbm [shape: f32[8,8], index: 16, kind: output, shape index: {2}]
  %17 = xla_tuple %s14, %s15, %s16
  %s18 = sld [smem:[#allocation0]]
  $region110: #{tpu_custom_call.1} parent=0
    _
  %s20 = ssub.s32 1, %s18
  %s21 = scalar_select 0, %s20, %s18
  $region1: #{tpu_custom_call.1} parent=0
    #allocation2 [shape = 'u8[4096]{0}', space=vmem, size = 0x1000, scoped, tag = 'input window, operand 0, single buffered']
    #allocation3 [shape = 's32[1]{0}', space=sflag, size = 0x4, scoped, tag = 'scoped memory for tpu_custom_call.1']
    #allocation4 [shape = 's32[1]{0}', space=sflag, size = 0x4, scoped, tag = 'scoped memory for tpu_custom_call.1']
    #allocation5 [shape = 'u8[4096]{0}', space=vmem, size = 0x1000, scoped, tag = 'input window, operand 1, single buffered']
    #allocation6 [shape = 's32[1]{0}', space=sflag, size = 0x4, scoped, tag = 'scoped memory for tpu_custom_call.1']
    #allocation7 [shape = 'u8[32768]{0}', space=vmem, size = 0x8000, scoped, tag = 'input window, operand 2, single buffered']
    #allocation8 [shape = 'u8[16384]{0}', space=vmem, size = 0x4000, scoped, tag = 'input window, operand 4, single buffered']
    #allocation9 [shape = 's32[1]{0}', space=sflag, size = 0x4, scoped, tag = 'scoped memory for tpu_custom_call.1']
    #allocation10 [shape = 'u8[16384]{0}', space=vmem, size = 0x4000, scoped, tag = 'input window, operand 7, single buffered']
    #allocation11 [shape = 'u8[24576]{0}', space=vmem, size = 0x6000, scoped, tag = 'input window, operand 8, single buffered']
    #allocation12 [shape = 's32[1]{0}', space=sflag, size = 0x4, scoped, tag = 'scoped memory for tpu_custom_call.1']
    #allocation13 [shape = 'u8[32768]{0}', space=vmem, size = 0x8000, scoped, tag = 'input window, operand 9, single buffered']
    #allocation14 [shape = 'u8[4096]{0}', space=vmem, size = 0x1000, scoped, tag = 'output window, operand 0, single buffered']
    #allocation15 [shape = 'u8[4096]{0}', space=vmem, size = 0x1000, scoped, tag = 'output window, operand 1, single buffered']
    #allocation16 [shape = 's32[1]{0}', space=sflag, size = 0x4, scoped, tag = 'scoped memory for tpu_custom_call.1']
    #allocation17 [shape = 'u8[4096]{0}', space=vmem, size = 0x1000, scoped, tag = 'output window, operand 2, single buffered']
    %22 = vsyncpa [#allocation3], 0
    %23 = vsyncpa [#allocation6], 0
    %24 = vsyncpa [#allocation9], 0
    %25 = vsyncpa [#allocation12], 0
    %26 = vsyncpa [#allocation4], 0
    %27 = vsyncpa [#allocation16], 0
    // Predicated region
    $region2: #{tpu_custom_call.1} parent=1 // pred_check
      _
    $region3: #{tpu_custom_call.1} parent=1 // pred_check_branch
      %29 = sbr.rel (0) target = $region5
    $region4: #{tpu_custom_call.1} parent=1 // pred_region
      %s31 = ssub.s32 128, 128
      %32 = vsyncadd [#allocation3], %s31
      %s34 = sshll.u32 [#allocation2], 4
      %s35 = int_to_ptr.vmem [resolvable:$true] %s34
      %37 = dma.hbm_to_vmem [thread:$0]  %s0, 128, %s35, [#allocation3]
    $region5: #{tpu_custom_call.1} parent=1 // pred_fallthru
      _
    // Predicated region
    $region6: #{tpu_custom_call.1} parent=1 // pred_check
      _
    $region7: #{tpu_custom_call.1} parent=1 // pred_check_branch
      %39 = sbr.rel (0) target = $region9
    $region8: #{tpu_custom_call.1} parent=1 // pred_region
      %s41 = ssub.s32 128, 128
      %42 = vsyncadd [#allocation6], %s41
      %s44 = sshll.u32 [#allocation5], 4
      %s45 = int_to_ptr.vmem [resolvable:$true] %s44
      %47 = dma.hbm_to_vmem [thread:$0]  %s1, 128, %s45, [#allocation6]
    $region9: #{tpu_custom_call.1} parent=1 // pred_fallthru
      _
    // Predicated region
    $region10: #{tpu_custom_call.1} parent=1 // pred_check
      _
    $region11: #{tpu_custom_call.1} parent=1 // pred_check_branch
      %49 = sbr.rel (0) target = $region13
    $region12: #{tpu_custom_call.1} parent=1 // pred_region
      %s51 = ssub.s32 1024, 1024
      %52 = vsyncadd [#allocation6], %s51
      %s53 = sshll.u32 [#allocation7], 4
      %s54 = int_to_ptr.vmem [resolvable:$true] %s53
      %59 = dma.hbm_to_vmem [thread:$0]  %s2, 1024, %s54, [#allocation6], 128, 128, 8
    $region13: #{tpu_custom_call.1} parent=1 // pred_fallthru
      _
    // Predicated region
    $region14: #{tpu_custom_call.1} parent=1 // pred_check
      _
    $region15: #{tpu_custom_call.1} parent=1 // pred_check_branch
      %61 = sbr.rel (0) target = $region17
    $region16: #{tpu_custom_call.1} parent=1 // pred_region
      _
    $region17: #{tpu_custom_call.1} parent=1 // pred_fallthru
      _
    // Predicated region
    $region18: #{tpu_custom_call.1} parent=1 // pred_check
      _
    $region19: #{tpu_custom_call.1} parent=1 // pred_check_branch
      %63 = sbr.rel (0) target = $region21
    $region20: #{tpu_custom_call.1} parent=1 // pred_region
      %s65 = ssub.s32 512, 512
      %66 = vsyncadd [#allocation9], %s65
      %s67 = sshll.u32 [#allocation8], 4
      %s68 = int_to_ptr.vmem [resolvable:$true] %s67
      %73 = dma.hbm_to_vmem [thread:$0]  %s4, 512, %s68, [#allocation9], 128, 128, 8
    $region21: #{tpu_custom_call.1} parent=1 // pred_fallthru
      _
    // Predicated region
    $region22: #{tpu_custom_call.1} parent=1 // pred_check
      _
    $region23: #{tpu_custom_call.1} parent=1 // pred_check_branch
      %75 = sbr.rel (0) target = $region25
    $region24: #{tpu_custom_call.1} parent=1 // pred_region
      _
    $region25: #{tpu_custom_call.1} parent=1 // pred_fallthru
      _
    // Predicated region
    $region26: #{tpu_custom_call.1} parent=1 // pred_check
      _
    $region27: #{tpu_custom_call.1} parent=1 // pred_check_branch
      %77 = sbr.rel (0) target = $region29
    $region28: #{tpu_custom_call.1} parent=1 // pred_region
      _
    $region29: #{tpu_custom_call.1} parent=1 // pred_fallthru
      _
    // Predicated region
    $region30: #{tpu_custom_call.1} parent=1 // pred_check
      _
    $region31: #{tpu_custom_call.1} parent=1 // pred_check_branch
      %79 = sbr.rel (0) target = $region33
    $region32: #{tpu_custom_call.1} parent=1 // pred_region
      %s81 = ssub.s32 512, 512
      %82 = vsyncadd [#allocation9], %s81
      %s83 = sshll.u32 [#allocation10], 4
      %s84 = int_to_ptr.vmem [resolvable:$true] %s83
      %89 = dma.hbm_to_vmem [thread:$0]  %s7, 512, %s84, [#allocation9], 128, 128, 8
    $region33: #{tpu_custom_call.1} parent=1 // pred_fallthru
      _
    // Predicated region
    $region34: #{tpu_custom_call.1} parent=1 // pred_check
      _
    $region35: #{tpu_custom_call.1} parent=1 // pred_check_branch
      %91 = sbr.rel (0) target = $region37
    $region36: #{tpu_custom_call.1} parent=1 // pred_region
      %s93 = ssub.s32 768, 768
      %94 = vsyncadd [#allocation12], %s93
      %s95 = sshll.u32 [#allocation11], 4
      %s96 = int_to_ptr.vmem [resolvable:$true] %s95
      %101 = dma.hbm_to_vmem [thread:$0]  %s8, 768, %s96, [#allocation12], 256, 256, 16
    $region37: #{tpu_custom_call.1} parent=1 // pred_fallthru
      _
    // Predicated region
    $region38: #{tpu_custom_call.1} parent=1 // pred_check
      _
    $region39: #{tpu_custom_call.1} parent=1 // pred_check_branch
      %103 = sbr.rel (0) target = $region41
    $region40: #{tpu_custom_call.1} parent=1 // pred_region
      %s105 = ssub.s32 1024, 1024
      %106 = vsyncadd [#allocation12], %s105
      %s107 = sshll.u32 [#allocation13], 4
      %s108 = int_to_ptr.vmem [resolvable:$true] %s107
      %113 = dma.hbm_to_vmem [thread:$0]  %s9, 1024, %s108, [#allocation12], 256, 256, 16
    $region41: #{tpu_custom_call.1} parent=1 // pred_fallthru
      _
    // Predicated region
    $region42: #{tpu_custom_call.1} parent=1 // pred_check
      _
    $region43: #{tpu_custom_call.1} parent=1 // pred_check_branch
      %115 = sbr.rel (0) target = $region45
    $region44: #{tpu_custom_call.1} parent=1 // pred_region
      _
    $region45: #{tpu_custom_call.1} parent=1 // pred_fallthru
      _
    // Predicated region
    $region46: #{tpu_custom_call.1} parent=1 // pred_check
      _
    $region47: #{tpu_custom_call.1} parent=1 // pred_check_branch
      %117 = sbr.rel (0) target = $region49
    $region48: #{tpu_custom_call.1} parent=1 // pred_region
      _
    $region49: #{tpu_custom_call.1} parent=1 // pred_fallthru
      _
    // Predicated region
    $region50: #{tpu_custom_call.1} parent=1 // pred_check
      _
    $region51: #{tpu_custom_call.1} parent=1 // pred_check_branch
      %119 = sbr.rel (0) target = $region53
    $region52: #{tpu_custom_call.1} parent=1 // pred_region
      _
    $region53: #{tpu_custom_call.1} parent=1 // pred_fallthru
      _
    // Predicated region
    $region54: #{tpu_custom_call.1} parent=1 // pred_check
      _
    $region55: #{tpu_custom_call.1} parent=1 // pred_check_branch
      %121 = sbr.rel (0) target = $region57
    $region56: #{tpu_custom_call.1} parent=1 // pred_region
      _
    $region57: #{tpu_custom_call.1} parent=1 // pred_fallthru
      _
    // Predicated region
    $region58: #{tpu_custom_call.1} parent=1 // pred_check
      _
    $region59: #{tpu_custom_call.1} parent=1 // pred_check_branch
      %123 = sbr.rel (0) target = $region61
    $region60: #{tpu_custom_call.1} parent=1 // pred_region
      %124 = dma.done [#allocation3], 128
    $region61: #{tpu_custom_call.1} parent=1 // pred_fallthru
      _
    // Predicated region
    $region62: #{tpu_custom_call.1} parent=1 // pred_check
      _
    $region63: #{tpu_custom_call.1} parent=1 // pred_check_branch
      %126 = sbr.rel (0) target = $region65
    $region64: #{tpu_custom_call.1} parent=1 // pred_region
      %127 = dma.done [#allocation6], 128
    $region65: #{tpu_custom_call.1} parent=1 // pred_fallthru
      _
    // Predicated region
    $region66: #{tpu_custom_call.1} parent=1 // pred_check
      _
    $region67: #{tpu_custom_call.1} parent=1 // pred_check_branch
      %129 = sbr.rel (0) target = $region69
    $region68: #{tpu_custom_call.1} parent=1 // pred_region
      %130 = dma.done [#allocation6], 1024
    $region69: #{tpu_custom_call.1} parent=1 // pred_fallthru
      _
    // Predicated region
    $region70: #{tpu_custom_call.1} parent=1 // pred_check
      _
    $region71: #{tpu_custom_call.1} parent=1 // pred_check_branch
      %132 = sbr.rel (0) target = $region73
    $region72: #{tpu_custom_call.1} parent=1 // pred_region
      %133 = dma.done [#allocation9], 512
    $region73: #{tpu_custom_call.1} parent=1 // pred_fallthru
      _
    // Predicated region
    $region74: #{tpu_custom_call.1} parent=1 // pred_check
      _
    $region75: #{tpu_custom_call.1} parent=1 // pred_check_branch
      %135 = sbr.rel (0) target = $region77
    $region76: #{tpu_custom_call.1} parent=1 // pred_region
      %136 = dma.done [#allocation9], 512
    $region77: #{tpu_custom_call.1} parent=1 // pred_fallthru
      _
    // Predicated region
    $region78: #{tpu_custom_call.1} parent=1 // pred_check
      _
    $region79: #{tpu_custom_call.1} parent=1 // pred_check_branch
      %138 = sbr.rel (0) target = $region81
    $region80: #{tpu_custom_call.1} parent=1 // pred_region
      %139 = dma.done [#allocation12], 768
    $region81: #{tpu_custom_call.1} parent=1 // pred_fallthru
      _
    // Predicated region
    $region82: #{tpu_custom_call.1} parent=1 // pred_check
      _
    $region83: #{tpu_custom_call.1} parent=1 // pred_check_branch
      %141 = sbr.rel (0) target = $region85
    $region84: #{tpu_custom_call.1} parent=1 // pred_region
      %142 = dma.done [#allocation12], 1024
    $region85: #{tpu_custom_call.1} parent=1 // pred_fallthru
      _
    %v143 = vld [vmem:[#allocation7] sm:$0xff]
    %v144 = vld [vmem:[#allocation7 + $0x8] sm:$0xff]
    %v145 = vld [vmem:[#allocation7 + $0x10] sm:$0xff]
    %v146 = vld [vmem:[#allocation7 + $0x18] sm:$0xff]
    %v147 = vld [vmem:[#allocation7 + $0x20] sm:$0xff]
    %v148 = vld [vmem:[#allocation7 + $0x28] sm:$0xff]
    %v149 = vld [vmem:[#allocation7 + $0x30] sm:$0xff]
    %v150 = vld [vmem:[#allocation7 + $0x38] sm:$0xff]
    %v151 = vld [vmem:[#allocation8] sm:$0xff]
    %v152 = vld [vmem:[#allocation8 + $0x8] sm:$0xff]
    %v153 = vld [vmem:[#allocation8 + $0x10] sm:$0xff]
    %v154 = vld [vmem:[#allocation8 + $0x18] sm:$0xff]
    %v155 = vld [vmem:[%s5] sm:$0x1]
    %v157 = vlaneseq
    %v158 = vshrl.u32 %v157, 7
    %v159 = vsub.s32 0, %v158
    %v160 = vrot.slane %v155, %v159
    %vm162 = vcmask 261120
    %v164 = vsel %vm162, %v143, 0
    %v167 = vsel %vm162, %v144, 0
    %v170 = vsel %vm162, %v145, 0
    %v173 = vsel %vm162, %v146, 0
    %v176 = vsel %vm162, %v147, 0
    %v179 = vsel %vm162, %v148, 0
    %v182 = vsel %vm162, %v149, 0
    %v185 = vsel %vm162, %v150, 0
    %187 = vmatprep.subr.mxu0 0.0
    %188 = vmatpush1.msra.mxu0 %v151
    %189 = vmatprep.subr.mxu0 0.0
    %190 = vmatpush1.msra.mxu0 %v152
    %191 = vmatprep.subr.mxu0 0.0
    %192 = vmatpush1.msra.mxu0 %v153
    %193 = vmatprep.subr.mxu0 0.0
    %194 = vmatpush1.msra.mxu0 %v154
    %195 = vmatprep.subr.mxu0 0.0
    %196 = vmatpush1.msra.mxu0 0.0
    %197 = vmatprep.subr.mxu0 0.0
    %198 = vmatpush1.msra.mxu0 0.0
    %199 = vmatprep.subr.mxu0 0.0
    %200 = vmatpush1.msra.mxu0 0.0
    %201 = vmatprep.subr.mxu0 0.0
    %202 = vmatpush1.msra.mxu0 0.0
    %203 = vmatprep.subr.mxu0 0.0
    %204 = vmatpush1.msra.mxu0 0.0
    %205 = vmatprep.subr.mxu0 0.0
    %206 = vmatpush1.msra.mxu0 0.0
    %207 = vmatprep.subr.mxu0 0.0
    %208 = vmatpush1.msra.mxu0 0.0
    %209 = vmatprep.subr.mxu0 0.0
    %210 = vmatpush1.msra.mxu0 0.0
    %211 = vmatprep.subr.mxu0 0.0
    %212 = vmatpush1.msra.mxu0 0.0
    %213 = vmatprep.subr.mxu0 0.0
    %214 = vmatpush1.msra.mxu0 0.0
    %215 = vmatprep.subr.mxu0 0.0
    %216 = vmatpush1.msra.mxu0 0.0
    %217 = vmatprep.subr.mxu0 0.0
    %218 = vmatpush1.msra.mxu0 0.0
    %219 = vmatprep.subr.mxu0 0.0
    %220 = vmatpush1.msra.mxu0 0.0
    %221 = vmatprep.subr.mxu0 0.0
    %222 = vmatpush1.msra.mxu0 0.0
    %223 = vmatprep.subr.mxu0 0.0
    %224 = vmatpush1.msra.mxu0 0.0
    %225 = vmatprep.subr.mxu0 0.0
    %226 = vmatpush1.msra.mxu0 0.0
    %227 = vmatprep.subr.mxu0 0.0
    %228 = vmatpush1.msra.mxu0 0.0
    %229 = vmatprep.subr.mxu0 0.0
    %230 = vmatpush1.msra.mxu0 0.0
    %231 = vmatprep.subr.mxu0 0.0
    %232 = vmatpush1.msra.mxu0 0.0
    %233 = vmatprep.subr.mxu0 0.0
    %234 = vmatpush1.msra.mxu0 0.0
    %235 = vmatprep.subr.mxu0 0.0
    %236 = vmatpush1.msra.mxu0 0.0
    %237 = vmatprep.subr.mxu0 0.0
    %238 = vmatpush1.msra.mxu0 0.0
    %239 = vmatprep.subr.mxu0 0.0
    %240 = vmatpush1.msra.mxu0 0.0
    %241 = vmatprep.subr.mxu0 0.0
    %242 = vmatpush1.msra.mxu0 0.0
    %243 = vmatprep.subr.mxu0 0.0
    %244 = vmatpush1.msra.mxu0 0.0
    %245 = vmatprep.subr.mxu0 0.0
    %246 = vmatpush1.msra.mxu0 0.0
    %247 = vmatprep.subr.mxu0 0.0
    %248 = vmatpush1.msra.mxu0 0.0
    %249 = vmatprep.subr.mxu0 0.0
    %250 = vmatpush1.msra.mxu0 0.0
    %251 = vmatprep.mubr.f32.mxu0 0.0
    %252 = vmatmul.mubr.f32.gmra.mrb[0].mxu0 %v164
    %v253 = vpop.f32.mrb[0].mxu0
    %v254 = vadd.f32 %v160, %v253
    %v255 = vpop.f32.mrb[0].mxu0
    %256 = vmatprep.mubr.f32.mxu0 0.0
    %257 = vmatmul.mubr.f32.gmra.mrb[0].mxu0 %v167
    %v258 = vpop.f32.mrb[0].mxu0
    %v259 = vadd.f32 %v160, %v258
    %v260 = vpop.f32.mrb[0].mxu0
    %261 = vmatprep.mubr.f32.mxu0 0.0
    %262 = vmatmul.mubr.f32.gmra.mrb[0].mxu0 %v170
    %v263 = vpop.f32.mrb[0].mxu0
    %v264 = vadd.f32 %v160, %v263
    %v265 = vpop.f32.mrb[0].mxu0
    %266 = vmatprep.mubr.f32.mxu0 0.0
    %267 = vmatmul.mubr.f32.gmra.mrb[0].mxu0 %v173
    %v268 = vpop.f32.mrb[0].mxu0
    %v269 = vadd.f32 %v160, %v268
    %v270 = vpop.f32.mrb[0].mxu0
    %271 = vmatprep.mubr.f32.mxu0 0.0
    %272 = vmatmul.mubr.f32.gmra.mrb[0].mxu0 %v176
    %v273 = vpop.f32.mrb[0].mxu0
    %v274 = vadd.f32 %v160, %v273
    %v275 = vpop.f32.mrb[0].mxu0
    %276 = vmatprep.mubr.f32.mxu0 0.0
    %277 = vmatmul.mubr.f32.gmra.mrb[0].mxu0 %v179
    %v278 = vpop.f32.mrb[0].mxu0
    %v279 = vadd.f32 %v160, %v278
    %v280 = vpop.f32.mrb[0].mxu0
    %281 = vmatprep.mubr.f32.mxu0 0.0
    %282 = vmatmul.mubr.f32.gmra.mrb[0].mxu0 %v182
    %v283 = vpop.f32.mrb[0].mxu0
    %v284 = vadd.f32 %v160, %v283
    %v285 = vpop.f32.mrb[0].mxu0
    %286 = vmatprep.mubr.f32.mxu0 0.0
    %287 = vmatmul.mubr.f32.gmra.mrb[0].mxu0 %v185
    %v288 = vpop.f32.mrb[0].mxu0
    %v289 = vadd.f32 %v160, %v288
    %v290 = vpop.f32.mrb[0].mxu0
    %291 = vdwg.mxu0
    %v292 = vld [vmem:[#allocation2] sm:$0xff]
    %v293 = vld [vmem:[#allocation5] sm:$0xff]
    %v294 = vld [vmem:[%s3] sm:$0xff]
    %v295 = vld [vmem:[%s6] sm:$0x1]
    %v296 = vld [vmem:[#allocation10] sm:$0xff]
    %v297 = vld [vmem:[#allocation10 + $0x8] sm:$0xff]
    %v298 = vld [vmem:[#allocation10 + $0x10] sm:$0xff]
    %v299 = vld [vmem:[#allocation10 + $0x18] sm:$0xff]
    %v300 = vld [vmem:[#allocation11] sm:$0xff]
    %v301 = vld [vmem:[#allocation11 + $0x8] sm:$0xff]
    %v302 = vld [vmem:[#allocation11 + $0x10] sm:$0xff]
    %v303 = vld [vmem:[#allocation11 + $0x18] sm:$0xff]
    %v304 = vld [vmem:[#allocation11 + $0x20] sm:$0xff]
    %v305 = vld [vmem:[#allocation11 + $0x28] sm:$0xff]
    %v306 = vld [vmem:[#allocation13] sm:$0xff]
    %v307 = vld [vmem:[#allocation13 + $0x8] sm:$0xff]
    %v308 = vld [vmem:[#allocation13 + $0x10] sm:$0xff]
    %v309 = vld [vmem:[#allocation13 + $0x18] sm:$0xff]
    %v310 = vld [vmem:[#allocation13 + $0x20] sm:$0xff]
    %v311 = vld [vmem:[#allocation13 + $0x28] sm:$0xff]
    %v312 = vld [vmem:[#allocation13 + $0x30] sm:$0xff]
    %v313 = vld [vmem:[#allocation13 + $0x38] sm:$0xff]
    %v314 = vld [vmem:[%s10] sm:$0x1]
    %v315 = vld [vmem:[%s11] sm:$0x1]
    %v316 = vld [vmem:[%s12] sm:$0xff]
    %v317 = vld [vmem:[%s12 + $0x8] sm:$0xff]
    %v318 = vld [vmem:[%s12 + $0x10] sm:$0xff]
    %v319 = vld [vmem:[%s12 + $0x18] sm:$0xff]
    %v320 = vld [vmem:[%s13] sm:$0x1]
    %v322 = vsel %vm162, %v293, 0
    %324 = vmatprep.subr.mxu0 0.0
    %325 = vmatpush1.msra.mxu0 %v296
    %326 = vmatprep.subr.mxu0 0.0
    %327 = vmatpush1.msra.mxu0 %v297
    %328 = vmatprep.subr.mxu0 0.0
    %329 = vmatpush1.msra.mxu0 %v298
    %330 = vmatprep.subr.mxu0 0.0
    %331 = vmatpush1.msra.mxu0 %v299
    %332 = vmatprep.subr.mxu0 0.0
    %333 = vmatpush1.msra.mxu0 0.0
    %334 = vmatprep.subr.mxu0 0.0
    %335 = vmatpush1.msra.mxu0 0.0
    %336 = vmatprep.subr.mxu0 0.0
    %337 = vmatpush1.msra.mxu0 0.0
    %338 = vmatprep.subr.mxu0 0.0
    %339 = vmatpush1.msra.mxu0 0.0
    %340 = vmatprep.subr.mxu0 0.0
    %341 = vmatpush1.msra.mxu0 0.0
    %342 = vmatprep.subr.mxu0 0.0
    %343 = vmatpush1.msra.mxu0 0.0
    %344 = vmatprep.subr.mxu0 0.0
    %345 = vmatpush1.msra.mxu0 0.0
    %346 = vmatprep.subr.mxu0 0.0
    %347 = vmatpush1.msra.mxu0 0.0
    %348 = vmatprep.subr.mxu0 0.0
    %349 = vmatpush1.msra.mxu0 0.0
    %350 = vmatprep.subr.mxu0 0.0
    %351 = vmatpush1.msra.mxu0 0.0
    %352 = vmatprep.subr.mxu0 0.0
    %353 = vmatpush1.msra.mxu0 0.0
    %354 = vmatprep.subr.mxu0 0.0
    %355 = vmatpush1.msra.mxu0 0.0
    %356 = vmatprep.subr.mxu0 0.0
    %357 = vmatpush1.msra.mxu0 0.0
    %358 = vmatprep.subr.mxu0 0.0
    %359 = vmatpush1.msra.mxu0 0.0
    %360 = vmatprep.subr.mxu0 0.0
    %361 = vmatpush1.msra.mxu0 0.0
    %362 = vmatprep.subr.mxu0 0.0
    %363 = vmatpush1.msra.mxu0 0.0
    %364 = vmatprep.subr.mxu0 0.0
    %365 = vmatpush1.msra.mxu0 0.0
    %366 = vmatprep.subr.mxu0 0.0
    %367 = vmatpush1.msra.mxu0 0.0
    %368 = vmatprep.subr.mxu0 0.0
    %369 = vmatpush1.msra.mxu0 0.0
    %370 = vmatprep.subr.mxu0 0.0
    %371 = vmatpush1.msra.mxu0 0.0
    %372 = vmatprep.subr.mxu0 0.0
    %373 = vmatpush1.msra.mxu0 0.0
    %374 = vmatprep.subr.mxu0 0.0
    %375 = vmatpush1.msra.mxu0 0.0
    %376 = vmatprep.subr.mxu0 0.0
    %377 = vmatpush1.msra.mxu0 0.0
    %378 = vmatprep.subr.mxu0 0.0
    %379 = vmatpush1.msra.mxu0 0.0
    %380 = vmatprep.subr.mxu0 0.0
    %381 = vmatpush1.msra.mxu0 0.0
    %382 = vmatprep.subr.mxu0 0.0
    %383 = vmatpush1.msra.mxu0 0.0
    %384 = vmatprep.subr.mxu0 0.0
    %385 = vmatpush1.msra.mxu0 0.0
    %386 = vmatprep.subr.mxu0 0.0
    %387 = vmatpush1.msra.mxu0 0.0
    %388 = vmatprep.mubr.f32.mxu0 0.0
    %389 = vmatmul.mubr.f32.gmra.mrb[0].mxu0 %v322
    %v390 = vpop.f32.mrb[0].mxu0
    %v391 = vadd.f32 0.0, %v390
    %v392 = vpop.f32.mrb[0].mxu0
    %393 = vdwg.mxu0
    %v395 = vlaneseq
    %v396 = vshrl.u32 %v395, 7
    %v397 = vsub.s32 0, %v396
    %v398 = vrot.slane %v315, %v397
    %399 = vrot.lane.b32.xlu0 %v398, 32
    %v400 = vpop.permute.xlu0 %399
    %v402 = vadd.f32 %v391, %v400
    %v404 = vcombine.high %v391, %v391
    %v406 = vunpack.c.l.s4 1966171168
    %v407 = vunpack.c.0.s8 %v406
    %v408 = vlaneseq
    %v409 = vshrl.u32 %v408, 7
    %v410 = vsub.s32 %v407, %v409
    %v411 = vrot.slane %v391, %v410
    %v413 = vunpack.c.l.s4 1966171168
    %v414 = vunpack.c.0.s8 %v413
    %v415 = vlaneseq
    %v416 = vshrl.u32 %v415, 7
    %v417 = vsub.s32 %v414, %v416
    %v418 = vrot.slane %v404, %v417
    %v419 = vcombine.high %v411, %v411
    %v420 = vcombine.high %v418, %v418
    %v422 = vunpack.c.l.s4 1966171168
    %v423 = vunpack.c.0.s8 %v422
    %v424 = vlaneseq
    %v425 = vshrl.u32 %v424, 7
    %v426 = vsub.s32 %v423, %v425
    %v427 = vrot.slane %v411, %v426
    %v429 = vunpack.c.l.s4 1966171168
    %v430 = vunpack.c.0.s8 %v429
    %v431 = vlaneseq
    %v432 = vshrl.u32 %v431, 7
    %v433 = vsub.s32 %v430, %v432
    %v434 = vrot.slane %v418, %v433
    %v436 = vunpack.c.l.s4 1966171168
    %v437 = vunpack.c.0.s8 %v436
    %v438 = vlaneseq
    %v439 = vshrl.u32 %v438, 7
    %v440 = vsub.s32 %v437, %v439
    %v441 = vrot.slane %v419, %v440
    %v443 = vunpack.c.l.s4 1966171168
    %v444 = vunpack.c.0.s8 %v443
    %v445 = vlaneseq
    %v446 = vshrl.u32 %v445, 7
    %v447 = vsub.s32 %v444, %v446
    %v448 = vrot.slane %v420, %v447
    %v449 = vcombine.high %v427, %v427
    %v450 = vcombine.high %v434, %v434
    %v451 = vcombine.high %v441, %v441
    %v452 = vcombine.high %v448, %v448
    %v453 = vlaneseq
    %v454 = vshrl.u32 %v453, 7
    %v455 = vsub.s32 0, %v454
    %v456 = vrot.slane %v427, %v455
    %v457 = vlaneseq
    %v458 = vshrl.u32 %v457, 7
    %v459 = vsub.s32 0, %v458
    %v460 = vrot.slane %v441, %v459
    %v461 = vlaneseq
    %v462 = vshrl.u32 %v461, 7
    %v463 = vsub.s32 0, %v462
    %v464 = vrot.slane %v449, %v463
    %v465 = vlaneseq
    %v466 = vshrl.u32 %v465, 7
    %v467 = vsub.s32 0, %v466
    %v468 = vrot.slane %v451, %v467
    %v469 = vlaneseq
    %v470 = vshrl.u32 %v469, 7
    %v471 = vsub.s32 0, %v470
    %v472 = vrot.slane %v434, %v471
    %v473 = vlaneseq
    %v474 = vshrl.u32 %v473, 7
    %v475 = vsub.s32 0, %v474
    %v476 = vrot.slane %v448, %v475
    %v477 = vlaneseq
    %v478 = vshrl.u32 %v477, 7
    %v479 = vsub.s32 0, %v478
    %v480 = vrot.slane %v450, %v479
    %v481 = vlaneseq
    %v482 = vshrl.u32 %v481, 7
    %v483 = vsub.s32 0, %v482
    %v484 = vrot.slane %v452, %v483
    %v493 = vadd.f32 %v254, %v456
    %v494 = vadd.f32 %v259, %v460
    %v495 = vadd.f32 %v264, %v464
    %v496 = vadd.f32 %v269, %v468
    %v497 = vadd.f32 %v274, %v472
    %v498 = vadd.f32 %v279, %v476
    %v499 = vadd.f32 %v284, %v480
    %v500 = vadd.f32 %v289, %v484
    %v501 = vtanh.pop %v493
    %v502 = vtanh.pop %v494
    %v503 = vtanh.pop %v495
    %v504 = vtanh.pop %v496
    %v505 = vtanh.pop %v497
    %v506 = vtanh.pop %v498
    %v507 = vtanh.pop %v499
    %v508 = vtanh.pop %v500
    %v510 = vlaneseq
    %v511 = vshrl.u32 %v510, 7
    %v512 = vsub.s32 0, %v511
    %v513 = vrot.slane %v295, %v512
    %v515 = vmul.f32 %v501, %v513
    %v516 = vmul.f32 %v502, %v513
    %v517 = vmul.f32 %v503, %v513
    %v518 = vmul.f32 %v504, %v513
    %v519 = vmul.f32 %v505, %v513
    %v520 = vmul.f32 %v506, %v513
    %v521 = vmul.f32 %v507, %v513
    %v522 = vmul.f32 %v508, %v513
    %v523 = vsel %vm162, %v515, 0.0
    %524 = vadd.xlane.f32.xlu0 %v523
    %v525 = vpop.xlane.xlu0 %524
    %v526 = vsel %vm162, %v516, 0.0
    %527 = vadd.xlane.f32.xlu0 %v526
    %v528 = vpop.xlane.xlu0 %527
    %v529 = vsel %vm162, %v517, 0.0
    %530 = vadd.xlane.f32.xlu0 %v529
    %v531 = vpop.xlane.xlu0 %530
    %v532 = vsel %vm162, %v518, 0.0
    %533 = vadd.xlane.f32.xlu0 %v532
    %v534 = vpop.xlane.xlu0 %533
    %v535 = vsel %vm162, %v519, 0.0
    %536 = vadd.xlane.f32.xlu0 %v535
    %v537 = vpop.xlane.xlu0 %536
    %v538 = vsel %vm162, %v520, 0.0
    %539 = vadd.xlane.f32.xlu0 %v538
    %v540 = vpop.xlane.xlu0 %539
    %v541 = vsel %vm162, %v521, 0.0
    %542 = vadd.xlane.f32.xlu0 %v541
    %v543 = vpop.xlane.xlu0 %542
    %v544 = vsel %vm162, %v522, 0.0
    %545 = vadd.xlane.f32.xlu0 %v544
    %v546 = vpop.xlane.xlu0 %545
    %v548 = vlaneseq
    %v549 = vshrl.u32 %v548, 7
    %v550 = vsub.s32 0, %v549
    %v551 = vrot.slane %v294, %v550
    %553 = vbcast.lane.b32.xlu0 %v551, 256
    %v554 = vpop.permute.xlu0 %553
    %v555 = vlaneseq
    %v556 = vshrl.u32 %v555, 7
    %v557 = vsub.s32 1, %v556
    %v558 = vrot.slane %v294, %v557
    %560 = vbcast.lane.b32.xlu0 %v558, 256
    %v561 = vpop.permute.xlu0 %560
    %v562 = vlaneseq
    %v563 = vshrl.u32 %v562, 7
    %v564 = vsub.s32 2, %v563
    %v565 = vrot.slane %v294, %v564
    %567 = vbcast.lane.b32.xlu0 %v565, 256
    %v568 = vpop.permute.xlu0 %567
    %v569 = vlaneseq
    %v570 = vshrl.u32 %v569, 7
    %v571 = vsub.s32 3, %v570
    %v572 = vrot.slane %v294, %v571
    %574 = vbcast.lane.b32.xlu0 %v572, 256
    %v575 = vpop.permute.xlu0 %574
    %v576 = vlaneseq
    %v577 = vshrl.u32 %v576, 7
    %v578 = vsub.s32 4, %v577
    %v579 = vrot.slane %v294, %v578
    %581 = vbcast.lane.b32.xlu0 %v579, 256
    %v582 = vpop.permute.xlu0 %581
    %v583 = vlaneseq
    %v584 = vshrl.u32 %v583, 7
    %v585 = vsub.s32 5, %v584
    %v586 = vrot.slane %v294, %v585
    %588 = vbcast.lane.b32.xlu0 %v586, 256
    %v589 = vpop.permute.xlu0 %588
    %v590 = vlaneseq
    %v591 = vshrl.u32 %v590, 7
    %v592 = vsub.s32 6, %v591
    %v593 = vrot.slane %v294, %v592
    %595 = vbcast.lane.b32.xlu0 %v593, 256
    %v596 = vpop.permute.xlu0 %595
    %v597 = vlaneseq
    %v598 = vshrl.u32 %v597, 7
    %v599 = vsub.s32 7, %v598
    %v600 = vrot.slane %v294, %v599
    %602 = vbcast.lane.b32.xlu0 %v600, 256
    %v603 = vpop.permute.xlu0 %602
    %v612 = vadd.f32 %v525, %v554
    %v613 = vadd.f32 %v528, %v561
    %v614 = vadd.f32 %v531, %v568
    %v615 = vadd.f32 %v534, %v575
    %v616 = vadd.f32 %v537, %v582
    %v617 = vadd.f32 %v540, %v589
    %v618 = vadd.f32 %v543, %v596
    %v619 = vadd.f32 %v546, %v603
    %628 = vset.pattern.permute.xlu0 0
    %629 = vperm.xlu0 %628, %v612
    %v630 = vpop.permute.xlu0 %629
    %631 = vset.pattern.permute.xlu0 0
    %632 = vperm.xlu0 %631, %v613
    %v633 = vpop.permute.xlu0 %632
    %634 = vset.pattern.permute.xlu0 0
    %635 = vperm.xlu0 %634, %v614
    %v636 = vpop.permute.xlu0 %635
    %637 = vset.pattern.permute.xlu0 0
    %638 = vperm.xlu0 %637, %v615
    %v639 = vpop.permute.xlu0 %638
    %640 = vset.pattern.permute.xlu0 0
    %641 = vperm.xlu0 %640, %v616
    %v642 = vpop.permute.xlu0 %641
    %643 = vset.pattern.permute.xlu0 0
    %644 = vperm.xlu0 %643, %v617
    %v645 = vpop.permute.xlu0 %644
    %646 = vset.pattern.permute.xlu0 0
    %647 = vperm.xlu0 %646, %v618
    %v648 = vpop.permute.xlu0 %647
    %649 = vset.pattern.permute.xlu0 0
    %650 = vperm.xlu0 %649, %v619
    %v651 = vpop.permute.xlu0 %650
    %v652 = vlaneseq
    %v653 = vand.u32 %v652, 127
    %v654 = vlaneseq
    %v655 = vshrl.u32 %v654, 7
    %v656 = vsub.s32 %v653, %v655
    %v657 = vrot.slane %v630, %v656
    %v658 = vlaneseq
    %v659 = vshrl.u32 %v658, 7
    %v660 = vsub.s32 %v653, %v659
    %v661 = vrot.slane %v633, %v660
    %v662 = vlaneseq
    %v663 = vshrl.u32 %v662, 7
    %v664 = vsub.s32 %v653, %v663
    %v665 = vrot.slane %v636, %v664
    %v666 = vlaneseq
    %v667 = vshrl.u32 %v666, 7
    %v668 = vsub.s32 %v653, %v667
    %v669 = vrot.slane %v639, %v668
    %v670 = vlaneseq
    %v671 = vshrl.u32 %v670, 7
    %v672 = vsub.s32 %v653, %v671
    %v673 = vrot.slane %v642, %v672
    %v674 = vlaneseq
    %v675 = vshrl.u32 %v674, 7
    %v676 = vsub.s32 %v653, %v675
    %v677 = vrot.slane %v645, %v676
    %v678 = vlaneseq
    %v679 = vshrl.u32 %v678, 7
    %v680 = vsub.s32 %v653, %v679
    %v681 = vrot.slane %v648, %v680
    %v682 = vlaneseq
    %v683 = vshrl.u32 %v682, 7
    %v684 = vsub.s32 %v653, %v683
    %v685 = vrot.slane %v651, %v684
    %vm686 = vcmask 1041409
    %v687 = vsel %vm686, %v661, %v657
    %vm688 = vcmask 1042434
    %v689 = vsel %vm688, %v665, %v687
    %vm690 = vcmask 1043459
    %v691 = vsel %vm690, %v669, %v689
    %vm692 = vcmask 1044484
    %v693 = vsel %vm692, %v673, %v691
    %vm694 = vcmask 1045509
    %v695 = vsel %vm694, %v677, %v693
    %vm696 = vcmask 1046534
    %v697 = vsel %vm696, %v681, %v695
    %vm698 = vcmask 1047559
    %v699 = vsel %vm698, %v685, %v697
    %vm701 = vcmask 64512
    %v702 = vsel %vm701, %v699, -inf
    %703 = vmax.xlane.f32.xlu0 %v702
    %v704 = vpop.xlane.xlu0 %703
    %v706 = vlaneseq
    %v707 = vshrl.u32 %v706, 7
    %v708 = vsub.s32 0, %v707
    %v709 = vrot.slane %v704, %v708
    %v710 = vlaneseq
    %v711 = vshrl.u32 %v710, 7
    %v712 = vsub.s32 1, %v711
    %v713 = vrot.slane %v704, %v712
    %v714 = vlaneseq
    %v715 = vshrl.u32 %v714, 7
    %v716 = vsub.s32 2, %v715
    %v717 = vrot.slane %v704, %v716
    %v718 = vlaneseq
    %v719 = vshrl.u32 %v718, 7
    %v720 = vsub.s32 3, %v719
    %v721 = vrot.slane %v704, %v720
    %v722 = vlaneseq
    %v723 = vshrl.u32 %v722, 7
    %v724 = vsub.s32 4, %v723
    %v725 = vrot.slane %v704, %v724
    %v726 = vlaneseq
    %v727 = vshrl.u32 %v726, 7
    %v728 = vsub.s32 5, %v727
    %v729 = vrot.slane %v704, %v728
    %v730 = vlaneseq
    %v731 = vshrl.u32 %v730, 7
    %v732 = vsub.s32 6, %v731
    %v733 = vrot.slane %v704, %v732
    %v734 = vlaneseq
    %v735 = vshrl.u32 %v734, 7
    %v736 = vsub.s32 7, %v735
    %v737 = vrot.slane %v704, %v736
    %v746 = vsub.f32 %v612, %v709
    %v747 = vsub.f32 %v613, %v713
    %v748 = vsub.f32 %v614, %v717
    %v749 = vsub.f32 %v615, %v721
    %v750 = vsub.f32 %v616, %v725
    %v751 = vsub.f32 %v617, %v729
    %v752 = vsub.f32 %v618, %v733
    %v753 = vsub.f32 %v619, %v737
    %v754 = vmul.f32 %v746, 1.442695
    %v755 = vpow.pop %v754
    %v756 = vmul.f32 %v747, 1.442695
    %v757 = vpow.pop %v756
    %v758 = vmul.f32 %v748, 1.442695
    %v759 = vpow.pop %v758
    %v760 = vmul.f32 %v749, 1.442695
    %v761 = vpow.pop %v760
    %v762 = vmul.f32 %v750, 1.442695
    %v763 = vpow.pop %v762
    %v764 = vmul.f32 %v751, 1.442695
    %v765 = vpow.pop %v764
    %v766 = vmul.f32 %v752, 1.442695
    %v767 = vpow.pop %v766
    %v768 = vmul.f32 %v753, 1.442695
    %v769 = vpow.pop %v768
    %778 = vset.pattern.permute.xlu0 0
    %779 = vperm.xlu0 %778, %v755
    %v780 = vpop.permute.xlu0 %779
    %781 = vset.pattern.permute.xlu0 0
    %782 = vperm.xlu0 %781, %v757
    %v783 = vpop.permute.xlu0 %782
    %784 = vset.pattern.permute.xlu0 0
    %785 = vperm.xlu0 %784, %v759
    %v786 = vpop.permute.xlu0 %785
    %787 = vset.pattern.permute.xlu0 0
    %788 = vperm.xlu0 %787, %v761
    %v789 = vpop.permute.xlu0 %788
    %790 = vset.pattern.permute.xlu0 0
    %791 = vperm.xlu0 %790, %v763
    %v792 = vpop.permute.xlu0 %791
    %793 = vset.pattern.permute.xlu0 0
    %794 = vperm.xlu0 %793, %v765
    %v795 = vpop.permute.xlu0 %794
    %796 = vset.pattern.permute.xlu0 0
    %797 = vperm.xlu0 %796, %v767
    %v798 = vpop.permute.xlu0 %797
    %799 = vset.pattern.permute.xlu0 0
    %800 = vperm.xlu0 %799, %v769
    %v801 = vpop.permute.xlu0 %800
    %v802 = vlaneseq
    %v803 = vshrl.u32 %v802, 7
    %v804 = vsub.s32 %v653, %v803
    %v805 = vrot.slane %v780, %v804
    %v806 = vlaneseq
    %v807 = vshrl.u32 %v806, 7
    %v808 = vsub.s32 %v653, %v807
    %v809 = vrot.slane %v783, %v808
    %v810 = vlaneseq
    %v811 = vshrl.u32 %v810, 7
    %v812 = vsub.s32 %v653, %v811
    %v813 = vrot.slane %v786, %v812
    %v814 = vlaneseq
    %v815 = vshrl.u32 %v814, 7
    %v816 = vsub.s32 %v653, %v815
    %v817 = vrot.slane %v789, %v816
    %v818 = vlaneseq
    %v819 = vshrl.u32 %v818, 7
    %v820 = vsub.s32 %v653, %v819
    %v821 = vrot.slane %v792, %v820
    %v822 = vlaneseq
    %v823 = vshrl.u32 %v822, 7
    %v824 = vsub.s32 %v653, %v823
    %v825 = vrot.slane %v795, %v824
    %v826 = vlaneseq
    %v827 = vshrl.u32 %v826, 7
    %v828 = vsub.s32 %v653, %v827
    %v829 = vrot.slane %v798, %v828
    %v830 = vlaneseq
    %v831 = vshrl.u32 %v830, 7
    %v832 = vsub.s32 %v653, %v831
    %v833 = vrot.slane %v801, %v832
    %v834 = vsel %vm686, %v809, %v805
    %v835 = vsel %vm688, %v813, %v834
    %v836 = vsel %vm690, %v817, %v835
    %v837 = vsel %vm692, %v821, %v836
    %v838 = vsel %vm694, %v825, %v837
    %v839 = vsel %vm696, %v829, %v838
    %v840 = vsel %vm698, %v833, %v839
    %v842 = vsel %vm701, %v840, 0.0
    %843 = vadd.xlane.f32.xlu0 %v842
    %v844 = vpop.xlane.xlu0 %843
    %v845 = vrcp.pop %v844
    %v847 = vlaneseq
    %v848 = vshrl.u32 %v847, 7
    %v849 = vsub.s32 0, %v848
    %v850 = vrot.slane %v845, %v849
    %v851 = vlaneseq
    %v852 = vshrl.u32 %v851, 7
    %v853 = vsub.s32 1, %v852
    %v854 = vrot.slane %v845, %v853
    %v855 = vlaneseq
    %v856 = vshrl.u32 %v855, 7
    %v857 = vsub.s32 2, %v856
    %v858 = vrot.slane %v845, %v857
    %v859 = vlaneseq
    %v860 = vshrl.u32 %v859, 7
    %v861 = vsub.s32 3, %v860
    %v862 = vrot.slane %v845, %v861
    %v863 = vlaneseq
    %v864 = vshrl.u32 %v863, 7
    %v865 = vsub.s32 4, %v864
    %v866 = vrot.slane %v845, %v865
    %v867 = vlaneseq
    %v868 = vshrl.u32 %v867, 7
    %v869 = vsub.s32 5, %v868
    %v870 = vrot.slane %v845, %v869
    %v871 = vlaneseq
    %v872 = vshrl.u32 %v871, 7
    %v873 = vsub.s32 6, %v872
    %v874 = vrot.slane %v845, %v873
    %v875 = vlaneseq
    %v876 = vshrl.u32 %v875, 7
    %v877 = vsub.s32 7, %v876
    %v878 = vrot.slane %v845, %v877
    %v887 = vmul.f32 %v755, %v850
    %v888 = vmul.f32 %v757, %v854
    %v889 = vmul.f32 %v759, %v858
    %v890 = vmul.f32 %v761, %v862
    %v891 = vmul.f32 %v763, %v866
    %v892 = vmul.f32 %v765, %v870
    %v893 = vmul.f32 %v767, %v874
    %v894 = vmul.f32 %v769, %v878
    %896 = vset.pattern.permute.xlu0 0
    %897 = vperm.xlu0 %896, %v887
    %v898 = vpop.permute.xlu0 %897
    %901 = vset.pattern.permute.xlu0 0
    %902 = vperm.xlu0 %901, %v888
    %v903 = vpop.permute.xlu0 %902
    %906 = vset.pattern.permute.xlu0 0
    %907 = vperm.xlu0 %906, %v889
    %v908 = vpop.permute.xlu0 %907
    %911 = vset.pattern.permute.xlu0 0
    %912 = vperm.xlu0 %911, %v890
    %v913 = vpop.permute.xlu0 %912
    %916 = vset.pattern.permute.xlu0 0
    %917 = vperm.xlu0 %916, %v891
    %v918 = vpop.permute.xlu0 %917
    %921 = vset.pattern.permute.xlu0 0
    %922 = vperm.xlu0 %921, %v892
    %v923 = vpop.permute.xlu0 %922
    %926 = vset.pattern.permute.xlu0 0
    %927 = vperm.xlu0 %926, %v893
    %v928 = vpop.permute.xlu0 %927
    %931 = vset.pattern.permute.xlu0 0
    %932 = vperm.xlu0 %931, %v894
    %v933 = vpop.permute.xlu0 %932
    %v935 = vmul.f32 %v898, %v143
    %v936 = vmul.f32 %v903, %v144
    %v937 = vmul.f32 %v908, %v145
    %v938 = vmul.f32 %v913, %v146
    %v939 = vmul.f32 %v918, %v147
    %v940 = vmul.f32 %v923, %v148
    %v941 = vmul.f32 %v928, %v149
    %v942 = vmul.f32 %v933, %v150
    %v943 = vsel %vm162, %v935, 0.0
    %v944 = vrot.slane %v943, 4
    %v945 = vadd.f32 %v943, %v944
    %v946 = vrot.slane %v945, 2
    %v947 = vadd.f32 %v945, %v946
    %v948 = vrot.slane %v947, 1
    %v949 = vadd.f32 %v947, %v948
    %v950 = vsel %vm162, %v936, 0.0
    %v951 = vrot.slane %v950, 4
    %v952 = vadd.f32 %v950, %v951
    %v953 = vrot.slane %v952, 2
    %v954 = vadd.f32 %v952, %v953
    %v955 = vrot.slane %v954, 1
    %v956 = vadd.f32 %v954, %v955
    %v957 = vsel %vm162, %v937, 0.0
    %v958 = vrot.slane %v957, 4
    %v959 = vadd.f32 %v957, %v958
    %v960 = vrot.slane %v959, 2
    %v961 = vadd.f32 %v959, %v960
    %v962 = vrot.slane %v961, 1
    %v963 = vadd.f32 %v961, %v962
    %v964 = vsel %vm162, %v938, 0.0
    %v965 = vrot.slane %v964, 4
    %v966 = vadd.f32 %v964, %v965
    %v967 = vrot.slane %v966, 2
    %v968 = vadd.f32 %v966, %v967
    %v969 = vrot.slane %v968, 1
    %v970 = vadd.f32 %v968, %v969
    %v971 = vsel %vm162, %v939, 0.0
    %v972 = vrot.slane %v971, 4
    %v973 = vadd.f32 %v971, %v972
    %v974 = vrot.slane %v973, 2
    %v975 = vadd.f32 %v973, %v974
    %v976 = vrot.slane %v975, 1
    %v977 = vadd.f32 %v975, %v976
    %v978 = vsel %vm162, %v940, 0.0
    %v979 = vrot.slane %v978, 4
    %v980 = vadd.f32 %v978, %v979
    %v981 = vrot.slane %v980, 2
    %v982 = vadd.f32 %v980, %v981
    %v983 = vrot.slane %v982, 1
    %v984 = vadd.f32 %v982, %v983
    %v985 = vsel %vm162, %v941, 0.0
    %v986 = vrot.slane %v985, 4
    %v987 = vadd.f32 %v985, %v986
    %v988 = vrot.slane %v987, 2
    %v989 = vadd.f32 %v987, %v988
    %v990 = vrot.slane %v989, 1
    %v991 = vadd.f32 %v989, %v990
    %v992 = vsel %vm162, %v942, 0.0
    %v993 = vrot.slane %v992, 4
    %v994 = vadd.f32 %v992, %v993
    %v995 = vrot.slane %v994, 2
    %v996 = vadd.f32 %v994, %v995
    %v997 = vrot.slane %v996, 1
    %v998 = vadd.f32 %v996, %v997
    %vm999 = vcmask 195584
    %v1001 = vsel %vm999, %v292, 0
    %1003 = vmatprep.subr.mxu0 %v301
    %1004 = vmatpush1.msra.mxu0 %v300
    %1005 = vmatprep.subr.mxu0 %v303
    %1006 = vmatpush1.msra.mxu0 %v302
    %1007 = vmatprep.subr.mxu0 %v305
    %1008 = vmatpush1.msra.mxu0 %v304
    %1009 = vmatprep.subr.mxu0 0.0
    %1010 = vmatpush1.msra.mxu0 0.0
    %1011 = vmatprep.subr.mxu0 0.0
    %1012 = vmatpush1.msra.mxu0 0.0
    %1013 = vmatprep.subr.mxu0 0.0
    %1014 = vmatpush1.msra.mxu0 0.0
    %1015 = vmatprep.subr.mxu0 0.0
    %1016 = vmatpush1.msra.mxu0 0.0
    %1017 = vmatprep.subr.mxu0 0.0
    %1018 = vmatpush1.msra.mxu0 0.0
    %1019 = vmatprep.subr.mxu0 0.0
    %1020 = vmatpush1.msra.mxu0 0.0
    %1021 = vmatprep.subr.mxu0 0.0
    %1022 = vmatpush1.msra.mxu0 0.0
    %1023 = vmatprep.subr.mxu0 0.0
    %1024 = vmatpush1.msra.mxu0 0.0
    %1025 = vmatprep.subr.mxu0 0.0
    %1026 = vmatpush1.msra.mxu0 0.0
    %1027 = vmatprep.subr.mxu0 0.0
    %1028 = vmatpush1.msra.mxu0 0.0
    %1029 = vmatprep.subr.mxu0 0.0
    %1030 = vmatpush1.msra.mxu0 0.0
    %1031 = vmatprep.subr.mxu0 0.0
    %1032 = vmatpush1.msra.mxu0 0.0
    %1033 = vmatprep.subr.mxu0 0.0
    %1034 = vmatpush1.msra.mxu0 0.0
    %1035 = vmatprep.subr.mxu0 0.0
    %1036 = vmatpush1.msra.mxu0 0.0
    %1037 = vmatprep.subr.mxu0 0.0
    %1038 = vmatpush1.msra.mxu0 0.0
    %1039 = vmatprep.subr.mxu0 0.0
    %1040 = vmatpush1.msra.mxu0 0.0
    %1041 = vmatprep.subr.mxu0 0.0
    %1042 = vmatpush1.msra.mxu0 0.0
    %1043 = vmatprep.subr.mxu0 0.0
    %1044 = vmatpush1.msra.mxu0 0.0
    %1045 = vmatprep.subr.mxu0 0.0
    %1046 = vmatpush1.msra.mxu0 0.0
    %1047 = vmatprep.subr.mxu0 0.0
    %1048 = vmatpush1.msra.mxu0 0.0
    %1049 = vmatprep.subr.mxu0 0.0
    %1050 = vmatpush1.msra.mxu0 0.0
    %1051 = vmatprep.subr.mxu0 0.0
    %1052 = vmatpush1.msra.mxu0 0.0
    %1053 = vmatprep.subr.mxu0 0.0
    %1054 = vmatpush1.msra.mxu0 0.0
    %1055 = vmatprep.subr.mxu0 0.0
    %1056 = vmatpush1.msra.mxu0 0.0
    %1057 = vmatprep.subr.mxu0 0.0
    %1058 = vmatpush1.msra.mxu0 0.0
    %1059 = vmatprep.subr.mxu0 0.0
    %1060 = vmatpush1.msra.mxu0 0.0
    %1061 = vmatprep.subr.mxu0 0.0
    %1062 = vmatpush1.msra.mxu0 0.0
    %1063 = vmatprep.subr.mxu0 0.0
    %1064 = vmatpush1.msra.mxu0 0.0
    %1065 = vmatprep.subr.mxu0 0.0
    %1066 = vmatpush1.msra.mxu0 0.0
    %1067 = vmatprep.mubr.f32.mxu0 0.0
    %1068 = vmatmul.mubr.f32.gmra.mrb[0].mxu0 %v1001
    %v1069 = vpop.f32.mrb[0].mxu0
    %v1070 = vadd.f32 0.0, %v1069
    %v1071 = vpop.f32.mrb[0].mxu0
    %v1072 = vadd.f32 0.0, %v1071
    %1073 = vdwg.mxu0
    %v1082 = vsel %vm686, %v956, %v949
    %v1083 = vsel %vm688, %v963, %v1082
    %v1084 = vsel %vm690, %v970, %v1083
    %v1085 = vsel %vm692, %v977, %v1084
    %v1086 = vsel %vm694, %v984, %v1085
    %v1087 = vsel %vm696, %v991, %v1086
    %v1088 = vsel %vm698, %v998, %v1087
    %v1089 = vsel %vm162, %v1088, 0
    %1091 = vmatprep.subr.mxu0 %v307
    %1092 = vmatpush1.msra.mxu0 %v306
    %1093 = vmatprep.subr.mxu0 %v309
    %1094 = vmatpush1.msra.mxu0 %v308
    %1095 = vmatprep.subr.mxu0 %v311
    %1096 = vmatpush1.msra.mxu0 %v310
    %1097 = vmatprep.subr.mxu0 %v313
    %1098 = vmatpush1.msra.mxu0 %v312
    %1099 = vmatprep.subr.mxu0 0.0
    %1100 = vmatpush1.msra.mxu0 0.0
    %1101 = vmatprep.subr.mxu0 0.0
    %1102 = vmatpush1.msra.mxu0 0.0
    %1103 = vmatprep.subr.mxu0 0.0
    %1104 = vmatpush1.msra.mxu0 0.0
    %1105 = vmatprep.subr.mxu0 0.0
    %1106 = vmatpush1.msra.mxu0 0.0
    %1107 = vmatprep.subr.mxu0 0.0
    %1108 = vmatpush1.msra.mxu0 0.0
    %1109 = vmatprep.subr.mxu0 0.0
    %1110 = vmatpush1.msra.mxu0 0.0
    %1111 = vmatprep.subr.mxu0 0.0
    %1112 = vmatpush1.msra.mxu0 0.0
    %1113 = vmatprep.subr.mxu0 0.0
    %1114 = vmatpush1.msra.mxu0 0.0
    %1115 = vmatprep.subr.mxu0 0.0
    %1116 = vmatpush1.msra.mxu0 0.0
    %1117 = vmatprep.subr.mxu0 0.0
    %1118 = vmatpush1.msra.mxu0 0.0
    %1119 = vmatprep.subr.mxu0 0.0
    %1120 = vmatpush1.msra.mxu0 0.0
    %1121 = vmatprep.subr.mxu0 0.0
    %1122 = vmatpush1.msra.mxu0 0.0
    %1123 = vmatprep.subr.mxu0 0.0
    %1124 = vmatpush1.msra.mxu0 0.0
    %1125 = vmatprep.subr.mxu0 0.0
    %1126 = vmatpush1.msra.mxu0 0.0
    %1127 = vmatprep.subr.mxu0 0.0
    %1128 = vmatpush1.msra.mxu0 0.0
    %1129 = vmatprep.subr.mxu0 0.0
    %1130 = vmatpush1.msra.mxu0 0.0
    %1131 = vmatprep.subr.mxu0 0.0
    %1132 = vmatpush1.msra.mxu0 0.0
    %1133 = vmatprep.subr.mxu0 0.0
    %1134 = vmatpush1.msra.mxu0 0.0
    %1135 = vmatprep.subr.mxu0 0.0
    %1136 = vmatpush1.msra.mxu0 0.0
    %1137 = vmatprep.subr.mxu0 0.0
    %1138 = vmatpush1.msra.mxu0 0.0
    %1139 = vmatprep.subr.mxu0 0.0
    %1140 = vmatpush1.msra.mxu0 0.0
    %1141 = vmatprep.subr.mxu0 0.0
    %1142 = vmatpush1.msra.mxu0 0.0
    %1143 = vmatprep.subr.mxu0 0.0
    %1144 = vmatpush1.msra.mxu0 0.0
    %1145 = vmatprep.subr.mxu0 0.0
    %1146 = vmatpush1.msra.mxu0 0.0
    %1147 = vmatprep.subr.mxu0 0.0
    %1148 = vmatpush1.msra.mxu0 0.0
    %1149 = vmatprep.subr.mxu0 0.0
    %1150 = vmatpush1.msra.mxu0 0.0
    %1151 = vmatprep.subr.mxu0 0.0
    %1152 = vmatpush1.msra.mxu0 0.0
    %1153 = vmatprep.subr.mxu0 0.0
    %1154 = vmatpush1.msra.mxu0 0.0
    %1155 = vmatprep.mubr.f32.mxu0 0.0
    %1156 = vmatmul.mubr.f32.gmra.mrb[0].mxu0 %v1089
    %v1157 = vpop.f32.mrb[0].mxu0
    %v1158 = vadd.f32 0.0, %v1157
    %v1159 = vpop.f32.mrb[0].mxu0
    %v1160 = vadd.f32 0.0, %v1159
    %1161 = vdwg.mxu0
    %v1162 = vadd.f32 %v1070, %v1158
    %v1164 = vlaneseq
    %v1165 = vshrl.u32 %v1164, 7
    %v1166 = vsub.s32 0, %v1165
    %v1167 = vrot.slane %v314, %v1166
    %v1169 = vadd.f32 %v1162, %v1167
    %v1170 = vadd.f32 %v1072, %v1160
    %1172 = vrot.lane.b32.xlu0 %v402, 96
    %v1173 = vpop.permute.xlu0 %1172
    %v1175 = vadd.f32 %v1169, %v1173
    %v1176 = vxor.u32 %v1175, 2147483648
    %v1177 = vmul.f32 %v1176, 1.442695
    %v1178 = vpow.pop %v1177
    %v1179 = vadd.f32 %v1178, 1.0
    %v1180 = vrcp.pop %v1179
    %v1181 = vmul.f32 1.0, %v1180
    %1182 = vrot.lane.b32.xlu0 %v402, 32
    %v1183 = vpop.permute.xlu0 %1182
    %v1185 = vmul.f32 %v1181, %v1183
    %1187 = vrot.lane.b32.xlu0 %v1185, 64
    %v1188 = vpop.permute.xlu0 %1187
    %v1190 = vadd.f32 %v1169, %v1188
    %v1191 = vtanh.pop %v1190
    %v1192 = vsub.f32 1.0, %v1181
    %1194 = vrot.lane.b32.xlu0 %v1191, 96
    %v1195 = vpop.permute.xlu0 %1194
    %v1197 = vmul.f32 %v1192, %v1195
    %1198 = vrot.lane.b32.xlu0 %v293, 32
    %v1199 = vpop.permute.xlu0 %1198
    %v1201 = vmul.f32 %v1181, %v1199
    %v1202 = vadd.f32 %v1197, %v1201
    %1204 = vrot.lane.b32.xlu0 %v1202, 96
    %v1205 = vpop.permute.xlu0 %1204
    %1208 = vrot.lane.b32.xlu0 %v1162, 32
    %v1209 = vpop.permute.xlu0 %1208
    %1210 = vrot.lane.b32.xlu0 %v1170, 32
    %v1211 = vpop.permute.xlu0 %1210
    %v1212 = vsel %vm162, %v1209, %v1211
    %v1214 = vsel %vm162, %v1205, 0
    %1216 = vmatprep.subr.mxu0 0.0
    %1217 = vmatpush1.msra.mxu0 %v316
    %1218 = vmatprep.subr.mxu0 0.0
    %1219 = vmatpush1.msra.mxu0 %v317
    %1220 = vmatprep.subr.mxu0 0.0
    %1221 = vmatpush1.msra.mxu0 %v318
    %1222 = vmatprep.subr.mxu0 0.0
    %1223 = vmatpush1.msra.mxu0 %v319
    %1224 = vmatprep.subr.mxu0 0.0
    %1225 = vmatpush1.msra.mxu0 0.0
    %1226 = vmatprep.subr.mxu0 0.0
    %1227 = vmatpush1.msra.mxu0 0.0
    %1228 = vmatprep.subr.mxu0 0.0
    %1229 = vmatpush1.msra.mxu0 0.0
    %1230 = vmatprep.subr.mxu0 0.0
    %1231 = vmatpush1.msra.mxu0 0.0
    %1232 = vmatprep.subr.mxu0 0.0
    %1233 = vmatpush1.msra.mxu0 0.0
    %1234 = vmatprep.subr.mxu0 0.0
    %1235 = vmatpush1.msra.mxu0 0.0
    %1236 = vmatprep.subr.mxu0 0.0
    %1237 = vmatpush1.msra.mxu0 0.0
    %1238 = vmatprep.subr.mxu0 0.0
    %1239 = vmatpush1.msra.mxu0 0.0
    %1240 = vmatprep.subr.mxu0 0.0
    %1241 = vmatpush1.msra.mxu0 0.0
    %1242 = vmatprep.subr.mxu0 0.0
    %1243 = vmatpush1.msra.mxu0 0.0
    %1244 = vmatprep.subr.mxu0 0.0
    %1245 = vmatpush1.msra.mxu0 0.0
    %1246 = vmatprep.subr.mxu0 0.0
    %1247 = vmatpush1.msra.mxu0 0.0
    %1248 = vmatprep.subr.mxu0 0.0
    %1249 = vmatpush1.msra.mxu0 0.0
    %1250 = vmatprep.subr.mxu0 0.0
    %1251 = vmatpush1.msra.mxu0 0.0
    %1252 = vmatprep.subr.mxu0 0.0
    %1253 = vmatpush1.msra.mxu0 0.0
    %1254 = vmatprep.subr.mxu0 0.0
    %1255 = vmatpush1.msra.mxu0 0.0
    %1256 = vmatprep.subr.mxu0 0.0
    %1257 = vmatpush1.msra.mxu0 0.0
    %1258 = vmatprep.subr.mxu0 0.0
    %1259 = vmatpush1.msra.mxu0 0.0
    %1260 = vmatprep.subr.mxu0 0.0
    %1261 = vmatpush1.msra.mxu0 0.0
    %1262 = vmatprep.subr.mxu0 0.0
    %1263 = vmatpush1.msra.mxu0 0.0
    %1264 = vmatprep.subr.mxu0 0.0
    %1265 = vmatpush1.msra.mxu0 0.0
    %1266 = vmatprep.subr.mxu0 0.0
    %1267 = vmatpush1.msra.mxu0 0.0
    %1268 = vmatprep.subr.mxu0 0.0
    %1269 = vmatpush1.msra.mxu0 0.0
    %1270 = vmatprep.subr.mxu0 0.0
    %1271 = vmatpush1.msra.mxu0 0.0
    %1272 = vmatprep.subr.mxu0 0.0
    %1273 = vmatpush1.msra.mxu0 0.0
    %1274 = vmatprep.subr.mxu0 0.0
    %1275 = vmatpush1.msra.mxu0 0.0
    %1276 = vmatprep.subr.mxu0 0.0
    %1277 = vmatpush1.msra.mxu0 0.0
    %1278 = vmatprep.subr.mxu0 0.0
    %1279 = vmatpush1.msra.mxu0 0.0
    %1280 = vmatprep.mubr.f32.mxu0 0.0
    %1281 = vmatmul.mubr.f32.gmra.mrb[0].mxu0 %v1214
    %v1282 = vpop.f32.mrb[0].mxu0
    %v1283 = vadd.f32 %v1212, %v1282
    %v1284 = vpop.f32.mrb[0].mxu0
    %1285 = vdwg.mxu0
    %v1287 = vlaneseq
    %v1288 = vshrl.u32 %v1287, 7
    %v1289 = vsub.s32 0, %v1288
    %v1290 = vrot.slane %v320, %v1289
    %v1292 = vadd.f32 %v1283, %v1290
    %vm1293 = vcmask 326656
    %1294 = vst.msk [vmem:[#allocation14] sm:$0xff] %vm1293, %v1292
    %1296 = vst.msk [vmem:[#allocation15] sm:$0xff] %vm162, %v1205
    %v1297 = vlaneseq
    %v1298 = vshrl.u32 %v1297, 7
    %v1299 = vsub.s32 %v653, %v1298
    %v1300 = vrot.slane %v898, %v1299
    %v1301 = vlaneseq
    %v1302 = vshrl.u32 %v1301, 7
    %v1303 = vsub.s32 %v653, %v1302
    %v1304 = vrot.slane %v903, %v1303
    %v1305 = vlaneseq
    %v1306 = vshrl.u32 %v1305, 7
    %v1307 = vsub.s32 %v653, %v1306
    %v1308 = vrot.slane %v908, %v1307
    %v1309 = vlaneseq
    %v1310 = vshrl.u32 %v1309, 7
    %v1311 = vsub.s32 %v653, %v1310
    %v1312 = vrot.slane %v913, %v1311
    %v1313 = vlaneseq
    %v1314 = vshrl.u32 %v1313, 7
    %v1315 = vsub.s32 %v653, %v1314
    %v1316 = vrot.slane %v918, %v1315
    %v1317 = vlaneseq
    %v1318 = vshrl.u32 %v1317, 7
    %v1319 = vsub.s32 %v653, %v1318
    %v1320 = vrot.slane %v923, %v1319
    %v1321 = vlaneseq
    %v1322 = vshrl.u32 %v1321, 7
    %v1323 = vsub.s32 %v653, %v1322
    %v1324 = vrot.slane %v928, %v1323
    %v1325 = vlaneseq
    %v1326 = vshrl.u32 %v1325, 7
    %v1327 = vsub.s32 %v653, %v1326
    %v1328 = vrot.slane %v933, %v1327
    %v1329 = vsel %vm686, %v1304, %v1300
    %v1330 = vsel %vm688, %v1308, %v1329
    %v1331 = vsel %vm690, %v1312, %v1330
    %v1332 = vsel %vm692, %v1316, %v1331
    %v1333 = vsel %vm694, %v1320, %v1332
    %v1334 = vsel %vm696, %v1324, %v1333
    %v1335 = vsel %vm698, %v1328, %v1334
    %1337 = vst.msk [vmem:[#allocation17] sm:$0xff] %vm701, %v1335
    // Predicated region
    $region86: #{tpu_custom_call.1} parent=1 // pred_check
      _
    $region87: #{tpu_custom_call.1} parent=1 // pred_check_branch
      %1339 = sbr.rel (0) target = $region89
    $region88: #{tpu_custom_call.1} parent=1 // pred_region
      %s1341 = ssub.s32 128, 128
      %1342 = vsyncadd [#allocation4], %s1341
      %s1344 = sshll.u32 [#allocation14], 4
      %s1345 = int_to_ptr.vmem [resolvable:$true] %s1344
      %1347 = dma.vmem_to_hbm [thread:$0]  %s1345, 128, %s14, [#allocation4]
    $region89: #{tpu_custom_call.1} parent=1 // pred_fallthru
      _
    // Predicated region
    $region90: #{tpu_custom_call.1} parent=1 // pred_check
      _
    $region91: #{tpu_custom_call.1} parent=1 // pred_check_branch
      %1349 = sbr.rel (0) target = $region93
    $region92: #{tpu_custom_call.1} parent=1 // pred_region
      %s1351 = ssub.s32 128, 128
      %1352 = vsyncadd [#allocation16], %s1351
      %s1354 = sshll.u32 [#allocation15], 4
      %s1355 = int_to_ptr.vmem [resolvable:$true] %s1354
      %1357 = dma.vmem_to_hbm [thread:$0]  %s1355, 128, %s15, [#allocation16]
    $region93: #{tpu_custom_call.1} parent=1 // pred_fallthru
      _
    // Predicated region
    $region94: #{tpu_custom_call.1} parent=1 // pred_check
      _
    $region95: #{tpu_custom_call.1} parent=1 // pred_check_branch
      %1359 = sbr.rel (0) target = $region97
    $region96: #{tpu_custom_call.1} parent=1 // pred_region
      %s1361 = ssub.s32 128, 128
      %1362 = vsyncadd [#allocation16], %s1361
      %s1364 = sshll.u32 [#allocation17], 4
      %s1365 = int_to_ptr.vmem [resolvable:$true] %s1364
      %1367 = dma.vmem_to_hbm [thread:$0]  %s1365, 128, %s16, [#allocation16]
    $region97: #{tpu_custom_call.1} parent=1 // pred_fallthru
      _
    // Predicated region
    $region98: #{tpu_custom_call.1} parent=1 // pred_check
      _
    $region99: #{tpu_custom_call.1} parent=1 // pred_check_branch
      %1369 = sbr.rel (0) target = $region101
    $region100: #{tpu_custom_call.1} parent=1 // pred_region
      %1370 = dma.done [#allocation4], 128
    $region101: #{tpu_custom_call.1} parent=1 // pred_fallthru
      _
    // Predicated region
    $region102: #{tpu_custom_call.1} parent=1 // pred_check
      _
    $region103: #{tpu_custom_call.1} parent=1 // pred_check_branch
      %1372 = sbr.rel (0) target = $region105
    $region104: #{tpu_custom_call.1} parent=1 // pred_region
      %1373 = dma.done [#allocation16], 128
    $region105: #{tpu_custom_call.1} parent=1 // pred_fallthru
      _
    // Predicated region
    $region106: #{tpu_custom_call.1} parent=1 // pred_check
      _
    $region107: #{tpu_custom_call.1} parent=1 // pred_check_branch
      %1375 = sbr.rel (0) target = $region109
    $region108: #{tpu_custom_call.1} parent=1 // pred_region
      %1376 = dma.done [#allocation16], 128
    $region109: #{tpu_custom_call.1} parent=1 // pred_fallthru
      _
    %1377 = vsyncpa [#allocation3], 1
    %1378 = vsyncpa [#allocation6], 1
    %1379 = vsyncpa [#allocation9], 1
    %1380 = vsyncpa [#allocation12], 1
    %1381 = vsyncpa [#allocation4], 1
    %1382 = vsyncpa [#allocation16], 1

</llo_original>
